<compile_context>
chip_gen: v7x
topology: tpu7x:2x2x1
jax: 0.10.0
libtpu: 0.0.40
codegen_flags: <defaults>
</compile_context>

<pallas_src>
import functools
import numpy as np
import jax
import jax.numpy as jnp
from jax import lax
from jax.experimental import pallas as pl
from jax.experimental.pallas import tpu as pltpu


CHUNK_ROWS = 8                      # sublane rows per grid step (one f32 vreg)
CHUNK_CELLS = CHUNK_ROWS * 128


# ----------------------------------------------------------------------------------------
# Pallas kernel: one grid step = one (image b, 8x128 spatial chunk ci); loops over the
# A=3 anchors of this head internally (anchor scalars live in SMEM).
# ----------------------------------------------------------------------------------------
def _conf_ignore_kernel(gt_ref, cnt_ref, anc_ref,            # SMEM tables
                        pred_ref, obj_ref, grid_ref,          # VMEM tiles
                        out_ref, ign_sc, *,
                        A, T_pad, HW, ignore_threshold):
    f32 = jnp.float32
    b = pl.program_id(0)
    ci = pl.program_id(1)

    gx = grid_ref[0]                                    # (8,128) grid x offsets
    gy = grid_ref[1]                                    # (8,128) grid y offsets

    # valid-cell mask: excludes the zero padding appended past H*W
    row = lax.broadcasted_iota(jnp.int32, (CHUNK_ROWS, 128), 0)
    lane = lax.broadcasted_iota(jnp.int32, (CHUNK_ROWS, 128), 1)
    flat = ci * CHUNK_CELLS + row * 128 + lane
    valid = flat < HW

    nt = cnt_ref[b]

    sum_conf = jnp.zeros((CHUNK_ROWS, 128), f32)
    cnt_conf = jnp.zeros((CHUNK_ROWS, 128), f32)

    for a in range(A):                                  # A == 3, static
        anchor_w = anc_ref[2 * a]
        anchor_h = anc_ref[2 * a + 1]
        c0 = a * 5

        p0 = pred_ref[0, c0 + 0].astype(f32)
        p1 = pred_ref[0, c0 + 1].astype(f32)
        p2 = pred_ref[0, c0 + 2].astype(f32)
        p3 = pred_ref[0, c0 + 3].astype(f32)
        zc = pred_ref[0, c0 + 4].astype(f32)            # conf logit

        # decode predicted boxes for this anchor / chunk
        px = jax.nn.sigmoid(p0) + gx
        py = jax.nn.sigmoid(p1) + gy
        pw = jnp.exp(p2) * anchor_w
        ph = jnp.exp(p3) * anchor_h
        px1 = px - pw * 0.5
        px2 = px + pw * 0.5
        py1 = py - ph * 0.5
        py2 = py + ph * 0.5
        parea = pw * ph

        # ignore pass: any gt box with IoU > thresh  <=>  inter > thresh * union
        ign_sc[...] = jnp.zeros_like(ign_sc)

        @pl.loop(0, nt)
        def _(t):
            base = (b * T_pad + t) * 8
            tx1 = gt_ref[base + 0]
            ty1 = gt_ref[base + 1]
            tx2 = gt_ref[base + 2]
            ty2 = gt_ref[base + 3]
            tarea = gt_ref[base + 4]
            iw = jnp.maximum(jnp.minimum(px2, tx2) - jnp.maximum(px1, tx1), 0.0)
            ih = jnp.maximum(jnp.minimum(py2, ty2) - jnp.maximum(py1, ty1), 0.0)
            inter = iw * ih
            union = parea + tarea - inter                # > 0 since parea > 0
            hit = (inter > ignore_threshold * union).astype(f32)
            ign_sc[...] = jnp.maximum(ign_sc[...], hit)

        ignore = ign_sc[...] > 0.0
        obj = obj_ref[0, a] > 0.5
        obj_f = obj.astype(f32)

        # conf BCE from logits (stable): max(z,0) - z*t + log(1 + exp(-|z|))
        bce = jnp.maximum(zc, 0.0) - zc * obj_f + jnp.log(1.0 + jnp.exp(-jnp.abs(zc)))
        keep = jnp.logical_or(
            obj,
            jnp.logical_and(valid,
                            jnp.logical_and(jnp.logical_not(obj),
                                            jnp.logical_not(ignore))))
        sum_conf = sum_conf + jnp.where(keep, bce, 0.0)
        cnt_conf = cnt_conf + keep.astype(f32)

    # lane/sublane partial sums; final scalar reduction happens in the wrapper
    out_ref[0, 0] = sum_conf
    out_ref[0, 1] = cnt_conf


# ----------------------------------------------------------------------------------------
# Host-side glue (mirrors YOLOLoss.get_target, a CPU ragged scatter in the PyTorch code)
# plus the tiny positive-cell (GIoU + class BCE) path as an XLA gather in the wrapper.
# ----------------------------------------------------------------------------------------
class YOLOLossPallas:
    def __init__(self, anchors, num_classes, input_shape,
                 anchors_mask=((6, 7, 8), (3, 4, 5), (0, 1, 2)), max_targets=32):
        self.anchors = [tuple(a) for a in anchors]
        self.num_classes = num_classes
        self.bbox_attrs = 5 + num_classes
        self.input_shape = input_shape
        self.anchors_mask = [list(m) for m in anchors_mask]
        self.balance = [0.4, 1.0, 4]
        self.box_ratio = 0.05
        self.obj_ratio = 5 * (input_shape[0] * input_shape[1]) / 416 ** 2
        self.cls_ratio = 1 * (num_classes / 80)
        self.ignore_threshold = 0.5
        self.max_targets = max_targets     # fixed pad to avoid per-call recompiles

    # ---- get_target: per-image best-anchor assignment (host numpy) ----------------------
    def _get_target_np(self, l, targets_list, scaled_anchors, in_h, in_w):
        """Returns {(b, k, j, i): (box4[cx,cy,w,h], class_onehot)}.
        Last write wins for the box; class bits are OR'ed (faithful to the reference)."""
        A_mask = self.anchors_mask[l]
        nc = self.num_classes
        anc = np.asarray(scaled_anchors, np.float32)          # (9, 2)
        pos = {}
        for b, t in enumerate(targets_list):
            t = np.asarray(t, np.float32)
            if t.size == 0:
                continue
            t = t.reshape(-1, 5)
            bt = np.zeros_like(t)
            bt[:, [0, 2]] = t[:, [0, 2]] * in_w
            bt[:, [1, 3]] = t[:, [1, 3]] * in_h
            bt[:, 4] = t[:, 4]
            gt_wh = bt[:, 2:4]
            # IoU of zero-centered (w, h) boxes == min(w)*min(h) / union
            inter = (np.minimum(gt_wh[:, None, 0], anc[None, :, 0]) *
                     np.minimum(gt_wh[:, None, 1], anc[None, :, 1]))
            area_a = (gt_wh[:, 0] * gt_wh[:, 1])[:, None]
            area_b = (anc[:, 0] * anc[:, 1])[None, :]
            iou = inter / (area_a + area_b - inter)
            best_ns = np.argmax(iou, axis=-1)
            for ti, best_n in enumerate(best_ns):
                if int(best_n) not in A_mask:
                    continue
                k = A_mask.index(int(best_n))
                i = min(int(np.floor(bt[ti, 0])), in_w - 1)
                j = min(int(np.floor(bt[ti, 1])), in_h - 1)
                c = int(bt[ti, 4])
                key = (b, k, j, i)
                onehot = pos[key][1] if key in pos else np.zeros((nc,), np.float32)
                onehot[c] = 1.0
                pos[key] = (bt[ti, :4].copy(), onehot)
        return pos

    def __call__(self, l, inputs, targets_list):
        inputs = jnp.asarray(inputs)
        bs, _, in_h, in_w = inputs.shape
        A = len(self.anchors_mask[l])
        C = self.bbox_attrs
        nc = self.num_classes
        HW = in_h * in_w
        n_chunks = -(-HW // CHUNK_CELLS)
        Gp = n_chunks * CHUNK_ROWS
        HWp = Gp * 128

        stride_h = self.input_shape[0] / in_h
        stride_w = self.input_shape[1] / in_w
        scaled_anchors = [(aw / stride_w, ah / stride_h) for aw, ah in self.anchors]
        anchors_l = np.asarray([scaled_anchors[i] for i in self.anchors_mask[l]], np.float32)

        # ---- dense Pallas inputs: only channels 0..4, lane-padded & chunk-aligned --------
        pred_all = inputs.reshape(bs, A, C, HW)                 # pure reshape of NCHW
        pred5 = pred_all[:, :, :5, :]                           # box + conf logits only
        if HWp != HW:
            pred5 = jnp.pad(pred5, ((0, 0), (0, 0), (0, 0), (0, HWp - HW)))
        pred5 = pred5.reshape(bs, A * 5, Gp, 128)               # keeps input dtype

        # host-side best-anchor assignment (ragged; no Pallas equivalent)
        pos = self._get_target_np(l, targets_list, scaled_anchors, in_h, in_w)

        # single dense obj plane per (image, anchor) — replaces y_true + noobj uploads
        obj_np = np.zeros((bs, A, HWp), np.float32)
        for (b, k, j, i) in pos:
            obj_np[b, k, j * in_w + i] = 1.0
        obj = jnp.asarray(obj_np.reshape(bs, A, Gp, 128))

        # precomputed grid offsets (x, y); zero in the padded tail
        hw_idx = np.arange(HWp)
        gxp = np.where(hw_idx < HW, hw_idx % in_w, 0).astype(np.float32)
        gyp = np.where(hw_idx < HW, hw_idx // in_w, 0).astype(np.float32)
        grid_xy = jnp.asarray(np.stack([gxp, gyp]).reshape(2, Gp, 128))

        # gt corner/area table (SMEM) + per-image counts, padded to fixed T_pad
        lengths = [int(np.asarray(t).reshape(-1, 5).shape[0]) if np.asarray(t).size else 0
                   for t in targets_list]
        T_pad = int(max(self.max_targets, max(lengths) if lengths else 0, 1))
        gt = np.zeros((bs, T_pad, 8), np.float32)
        counts = np.zeros((bs,), np.int32)
        for b, t in enumerate(targets_list):
            t = np.asarray(t, np.float32)
            if t.size == 0:
                continue
            t = t.reshape(-1, 5)
            n = min(t.shape[0], T_pad)
            counts[b] = n
            cx = t[:n, 0] * in_w
            cy = t[:n, 1] * in_h
            tw = t[:n, 2] * in_w
            th = t[:n, 3] * in_h
            gt[b, :n, 0] = cx - tw * 0.5
            gt[b, :n, 1] = cy - th * 0.5
            gt[b, :n, 2] = cx + tw * 0.5
            gt[b, :n, 3] = cy + th * 0.5
            gt[b, :n, 4] = tw * th
        gt_flat = jnp.asarray(gt.reshape(-1))
        counts_j = jnp.asarray(counts)
        anchors_flat = jnp.asarray(anchors_l.reshape(-1))

        kernel = functools.partial(_conf_ignore_kernel, A=A, T_pad=T_pad, HW=HW,
                                   ignore_threshold=self.ignore_threshold)
        smem = pl.BlockSpec(memory_space=pltpu.MemorySpace.SMEM)

        sums = pl.pallas_call(
            kernel,
            out_shape=jax.ShapeDtypeStruct((bs * n_chunks, 2, CHUNK_ROWS, 128),
                                           jnp.float32),
            grid=(bs, n_chunks),
            in_specs=[
                smem,                                                   # gt boxes (flat f32)
                smem,                                                   # per-image counts
                smem,                                                   # scaled anchors
                pl.BlockSpec((1, A * 5, CHUNK_ROWS, 128),
                             lambda b, c: (b, 0, c, 0)),                # pred ch 0..4
                pl.BlockSpec((1, A, CHUNK_ROWS, 128),
                             lambda b, c: (b, 0, c, 0)),                # obj plane
                pl.BlockSpec((2, CHUNK_ROWS, 128),
                             lambda b, c: (0, c, 0)),                   # grid offsets
            ],
            out_specs=pl.BlockSpec((1, 2, CHUNK_ROWS, 128),
                                   lambda b, c: (b * n_chunks + c, 0, 0, 0)),
            scratch_shapes=[pltpu.VMEM((CHUNK_ROWS, 128), jnp.float32)],
            compiler_params=pltpu.CompilerParams(
                dimension_semantics=("parallel", "parallel")),
        )(gt_flat, counts_j, anchors_flat, pred5, obj, grid_xy)

        sum_conf = jnp.sum(sums[:, 0])
        cnt_conf = jnp.sum(sums[:, 1])
        loss = (sum_conf / jnp.maximum(cnt_conf, 1.0)) * self.balance[l] * self.obj_ratio

        # ---- positive-cell terms: tiny padded XLA gather, computed outside the kernel ---
        n_pos = len(pos)
        if n_pos > 0:
            Npad = int(max(bs * self.max_targets, n_pos))
            p_plane = np.zeros((Npad,), np.int32)
            p_cell = np.zeros((Npad,), np.int32)
            p_gx = np.zeros((Npad,), np.float32)
            p_gy = np.zeros((Npad,), np.float32)
            p_aw = np.ones((Npad,), np.float32)
            p_ah = np.ones((Npad,), np.float32)
            p_box = np.zeros((Npad, 4), np.float32)
            p_cls = np.zeros((Npad, nc), np.float32)
            p_val = np.zeros((Npad,), np.float32)
            for idx, ((b, k, j, i), (box, onehot)) in enumerate(pos.items()):
                p_plane[idx] = b * A + k
                p_cell[idx] = j * in_w + i
                p_gx[idx] = float(i)
                p_gy[idx] = float(j)
                p_aw[idx] = anchors_l[k, 0]
                p_ah[idx] = anchors_l[k, 1]
                p_box[idx] = box
                p_cls[idx] = onehot
                p_val[idx] = 1.0

            pred_flat = inputs.reshape(bs * A, C, HW).astype(jnp.float32)
            g = pred_flat[jnp.asarray(p_plane)[:, None],
                          jnp.arange(C)[None, :],
                          jnp.asarray(p_cell)[:, None]]                 # (Npad, C)

            px = jax.nn.sigmoid(g[:, 0]) + jnp.asarray(p_gx)
            py = jax.nn.sigmoid(g[:, 1]) + jnp.asarray(p_gy)
            pw = jnp.exp(g[:, 2]) * jnp.asarray(p_aw)
            ph = jnp.exp(g[:, 3]) * jnp.asarray(p_ah)
            b1x1, b1x2 = px - pw * 0.5, px + pw * 0.5
            b1y1, b1y2 = py - ph * 0.5, py + ph * 0.5
            tb = jnp.asarray(p_box)
            tx, ty, tw, th = tb[:, 0], tb[:, 1], tb[:, 2], tb[:, 3]
            b2x1, b2x2 = tx - tw * 0.5, tx + tw * 0.5
            b2y1, b2y2 = ty - th * 0.5, ty + th * 0.5
            iw = jnp.maximum(jnp.minimum(b1x2, b2x2) - jnp.maximum(b1x1, b2x1), 0.0)
            ih = jnp.maximum(jnp.minimum(b1y2, b2y2) - jnp.maximum(b1y1, b2y1), 0.0)
            inter = iw * ih
            union = pw * ph + tw * th - inter
            iou = inter / jnp.maximum(union, 1e-9)
            ew = jnp.maximum(jnp.maximum(b1x2, b2x2) - jnp.minimum(b1x1, b2x1), 0.0)
            eh = jnp.maximum(jnp.maximum(b1y2, b2y2) - jnp.minimum(b1y1, b2y1), 0.0)
            enclose = ew * eh
            giou = iou - (enclose - union) / jnp.maximum(enclose, 1e-9)

            valid = jnp.asarray(p_val)
            sum_loc = jnp.sum(valid * (1.0 - giou))

            zc = g[:, 5:]
            tcls = jnp.asarray(p_cls)
            bce_cls = (jnp.maximum(zc, 0.0) - zc * tcls
                       + jnp.log(1.0 + jnp.exp(-jnp.abs(zc))))
            sum_cls = jnp.sum(valid[:, None] * bce_cls)

            loss = loss + (self.box_ratio * sum_loc / n_pos
                           + self.cls_ratio * sum_cls / (n_pos * nc))
        return loss


if __name__ == "__main__":
    key = jax.random.PRNGKey(0)
    num_classes = 20
    anchors = [(10, 13), (16, 30), (33, 23), (30, 61), (62, 45), (59, 119),
               (116, 90), (156, 198), (373, 326)]
    input_shape = (512, 512)
    bs, in_h, in_w = 2, 16, 16
    l = 0
    A = 3
    C = 5 + num_classes

    k1, k2, k3, k4 = jax.random.split(key, 4)
    x = jax.random.normal(k1, (bs, A * C, in_h, in_w), dtype=jnp.float32)

    # deterministic ragged targets: list of (n_t, 5) arrays, normalized xywh + class
    n_t = 3
    xy = np.asarray(jax.random.uniform(k2, (bs, n_t, 2), minval=0.2, maxval=0.8))
    wh = np.asarray(jax.random.uniform(k3, (bs, n_t, 2), minval=0.15, maxval=0.35))
    cls = np.asarray(jax.random.randint(k4, (bs, n_t, 1), 0, num_classes)).astype(np.float32)
    targets_list = [np.concatenate([xy[b], wh[b], cls[b]], axis=-1).astype(np.float32)
                    for b in range(bs)]

    loss_fn = YOLOLossPallas(anchors, num_classes, input_shape)
    loss = loss_fn(l, x, targets_list)
    loss = jax.block_until_ready(loss)
    assert np.isfinite(np.asarray(loss)).all()
    print("KERNEL_OK")
</pallas_src>

<mosaic_0001>
module attributes {stable_mosaic.version = 11 : i64} {
  func.func @_conf_ignore_kernel(%arg0: i32, %arg1: i32, %arg2: memref<512xf32, #tpu.memory_space<smem>>, %arg3: memref<2xi32, #tpu.memory_space<smem>>, %arg4: memref<6xf32, #tpu.memory_space<smem>>, %arg5: memref<1x15x8x128xf32, #tpu.memory_space<vmem>>, %arg6: memref<1x3x8x128xf32, #tpu.memory_space<vmem>>, %arg7: memref<2x8x128xf32, #tpu.memory_space<vmem>>, %arg8: memref<1x2x8x128xf32, #tpu.memory_space<vmem>>, %arg9: memref<8x128xf32, #tpu.memory_space<vmem>>) attributes {dimension_semantics = [#tpu.dimension_semantics<parallel>, #tpu.dimension_semantics<parallel>], iteration_bounds = array<i64: 2, 1>, scalar_prefetch = 0 : i64, scratch_operands = 1 : i64, tpu.core_type = #tpu.core_type<tc>, window_params = [{transform_indices = @transform_0, window_bounds = array<i64: 512>}, {transform_indices = @transform_1, window_bounds = array<i64: 2>}, {transform_indices = @transform_2, window_bounds = array<i64: 6>}, {transform_indices = @transform_3, window_bounds = array<i64: 1, 15, 8, 128>}, {transform_indices = @transform_4, window_bounds = array<i64: 1, 3, 8, 128>}, {transform_indices = @transform_5, window_bounds = array<i64: 2, 8, 128>}, {transform_indices = @transform_6, window_bounds = array<i64: 1, 2, 8, 128>}]} {
    %c0 = arith.constant 0 : index
    %c0_0 = arith.constant 0 : index
    %c0_1 = arith.constant 0 : index
    %0 = vector.load %arg7[%c0, %c0_0, %c0_1] : memref<2x8x128xf32, #tpu.memory_space<vmem>>, vector<1x8x128xf32>
    %1 = vector.shape_cast %0 : vector<1x8x128xf32> to vector<8x128xf32>
    %c1 = arith.constant 1 : index
    %c0_2 = arith.constant 0 : index
    %c0_3 = arith.constant 0 : index
    %2 = vector.load %arg7[%c1, %c0_2, %c0_3] : memref<2x8x128xf32, #tpu.memory_space<vmem>>, vector<1x8x128xf32>
    %3 = vector.shape_cast %2 : vector<1x8x128xf32> to vector<8x128xf32>
    %4 = tpu.iota {dimensions = array<i32: 0>} : vector<8x128xi32>
    %5 = tpu.iota {dimensions = array<i32: 1>} : vector<8x128xi32>
    %c1024_i32 = arith.constant 1024 : i32
    %6 = arith.muli %arg1, %c1024_i32 : i32
    %c128_i32 = arith.constant 128 : i32
    %7 = vector.broadcast %c128_i32 : i32 to vector<8x128xi32>
    %8 = arith.muli %4, %7 : vector<8x128xi32>
    %9 = vector.broadcast %6 : i32 to vector<8x128xi32>
    %10 = arith.addi %9, %8 : vector<8x128xi32>
    %11 = arith.addi %10, %5 : vector<8x128xi32>
    %c256_i32 = arith.constant 256 : i32
    %12 = vector.broadcast %c256_i32 : i32 to vector<8x128xi32>
    %13 = arith.cmpi slt, %11, %12 : vector<8x128xi32>
    %14 = arith.index_cast %arg0 : i32 to index
    %15 = memref.load %arg3[%14] : memref<2xi32, #tpu.memory_space<smem>>
    %cst = arith.constant 0.000000e+00 : f32
    %16 = vector.broadcast %cst : f32 to vector<8x128xf32>
    %cst_4 = arith.constant 0.000000e+00 : f32
    %17 = vector.broadcast %cst_4 : f32 to vector<8x128xf32>
    %c0_5 = arith.constant 0 : index
    %18 = memref.load %arg4[%c0_5] : memref<6xf32, #tpu.memory_space<smem>>
    %c1_6 = arith.constant 1 : index
    %19 = memref.load %arg4[%c1_6] : memref<6xf32, #tpu.memory_space<smem>>
    %c0_7 = arith.constant 0 : index
    %c0_8 = arith.constant 0 : index
    %c0_9 = arith.constant 0 : index
    %c0_10 = arith.constant 0 : index
    %20 = vector.load %arg5[%c0_7, %c0_8, %c0_9, %c0_10] : memref<1x15x8x128xf32, #tpu.memory_space<vmem>>, vector<1x1x8x128xf32>
    %21 = vector.shape_cast %20 : vector<1x1x8x128xf32> to vector<8x128xf32>
    %c0_11 = arith.constant 0 : index
    %c1_12 = arith.constant 1 : index
    %c0_13 = arith.constant 0 : index
    %c0_14 = arith.constant 0 : index
    %22 = vector.load %arg5[%c0_11, %c1_12, %c0_13, %c0_14] : memref<1x15x8x128xf32, #tpu.memory_space<vmem>>, vector<1x1x8x128xf32>
    %23 = vector.shape_cast %22 : vector<1x1x8x128xf32> to vector<8x128xf32>
    %c0_15 = arith.constant 0 : index
    %c2 = arith.constant 2 : index
    %c0_16 = arith.constant 0 : index
    %c0_17 = arith.constant 0 : index
    %24 = vector.load %arg5[%c0_15, %c2, %c0_16, %c0_17] : memref<1x15x8x128xf32, #tpu.memory_space<vmem>>, vector<1x1x8x128xf32>
    %25 = vector.shape_cast %24 : vector<1x1x8x128xf32> to vector<8x128xf32>
    %c0_18 = arith.constant 0 : index
    %c3 = arith.constant 3 : index
    %c0_19 = arith.constant 0 : index
    %c0_20 = arith.constant 0 : index
    %26 = vector.load %arg5[%c0_18, %c3, %c0_19, %c0_20] : memref<1x15x8x128xf32, #tpu.memory_space<vmem>>, vector<1x1x8x128xf32>
    %27 = vector.shape_cast %26 : vector<1x1x8x128xf32> to vector<8x128xf32>
    %c0_21 = arith.constant 0 : index
    %c4 = arith.constant 4 : index
    %c0_22 = arith.constant 0 : index
    %c0_23 = arith.constant 0 : index
    %28 = vector.load %arg5[%c0_21, %c4, %c0_22, %c0_23] : memref<1x15x8x128xf32, #tpu.memory_space<vmem>>, vector<1x1x8x128xf32>
    %29 = vector.shape_cast %28 : vector<1x1x8x128xf32> to vector<8x128xf32>
    %30 = arith.negf %21 : vector<8x128xf32>
    %31 = math.exp %30 : vector<8x128xf32>
    %cst_24 = arith.constant 1.000000e+00 : f32
    %32 = vector.broadcast %cst_24 : f32 to vector<8x128xf32>
    %33 = arith.addf %32, %31 : vector<8x128xf32>
    %34 = arith.divf %32, %33 : vector<8x128xf32>
    %35 = arith.addf %34, %1 : vector<8x128xf32>
    %36 = arith.negf %23 : vector<8x128xf32>
    %37 = math.exp %36 : vector<8x128xf32>
    %cst_25 = arith.constant 1.000000e+00 : f32
    %38 = vector.broadcast %cst_25 : f32 to vector<8x128xf32>
    %39 = arith.addf %38, %37 : vector<8x128xf32>
    %40 = arith.divf %38, %39 : vector<8x128xf32>
    %41 = arith.addf %40, %3 : vector<8x128xf32>
    %42 = math.exp %25 : vector<8x128xf32>
    %43 = vector.broadcast %18 : f32 to vector<8x128xf32>
    %44 = arith.mulf %42, %43 : vector<8x128xf32>
    %45 = math.exp %27 : vector<8x128xf32>
    %46 = vector.broadcast %19 : f32 to vector<8x128xf32>
    %47 = arith.mulf %45, %46 : vector<8x128xf32>
    %cst_26 = arith.constant 5.000000e-01 : f32
    %48 = vector.broadcast %cst_26 : f32 to vector<8x128xf32>
    %49 = arith.mulf %44, %48 : vector<8x128xf32>
    %50 = arith.subf %35, %49 : vector<8x128xf32>
    %cst_27 = arith.constant 5.000000e-01 : f32
    %51 = vector.broadcast %cst_27 : f32 to vector<8x128xf32>
    %52 = arith.mulf %44, %51 : vector<8x128xf32>
    %53 = arith.addf %35, %52 : vector<8x128xf32>
    %cst_28 = arith.constant 5.000000e-01 : f32
    %54 = vector.broadcast %cst_28 : f32 to vector<8x128xf32>
    %55 = arith.mulf %47, %54 : vector<8x128xf32>
    %56 = arith.subf %41, %55 : vector<8x128xf32>
    %cst_29 = arith.constant 5.000000e-01 : f32
    %57 = vector.broadcast %cst_29 : f32 to vector<8x128xf32>
    %58 = arith.mulf %47, %57 : vector<8x128xf32>
    %59 = arith.addf %41, %58 : vector<8x128xf32>
    %60 = arith.mulf %44, %47 : vector<8x128xf32>
    %cst_30 = arith.constant 0.000000e+00 : f32
    %61 = vector.broadcast %cst_30 : f32 to vector<8x128xf32>
    %c0_31 = arith.constant 0 : index
    %c0_32 = arith.constant 0 : index
    %62 = vector.load %arg9[%c0_31, %c0_32] : memref<8x128xf32, #tpu.memory_space<vmem>>, vector<8x128xf32>
    tpu.vector_store %arg9[%c0_31, %c0_32], %61 {strides = array<i32>} : memref<8x128xf32, #tpu.memory_space<vmem>>, vector<8x128xf32>,
    %c0_i32 = arith.constant 0 : i32
    %63 = arith.subi %15, %c0_i32 : i32
    %c1_i32 = arith.constant 1 : i32
    %c1_i32_33 = arith.constant 1 : i32
    %64 = arith.subi %c1_i32, %c1_i32_33 : i32
    %65 = arith.addi %63, %64 : i32
    %c1_i32_34 = arith.constant 1 : i32
    %66 = arith.divsi %65, %c1_i32_34 : i32
    %c1_i32_35 = arith.constant 1 : i32
    %c0_i32_36 = arith.constant 0 : i32
    %c0_i32_37 = arith.constant 0 : i32
    %67 = arith.subi %66, %c0_i32_37 : i32
    %68 = arith.addi %c0_i32_37, %67 : i32
    %c1_i32_38 = arith.constant 1 : i32
    scf.for %arg10 = %c0_i32_37 to %68 step %c1_i32_38  : i32 {
      %273 = arith.muli %arg10, %c1_i32_35 : i32
      %274 = arith.addi %c0_i32_36, %273 : i32
      %c32_i32 = arith.constant 32 : i32
      %275 = arith.muli %arg0, %c32_i32 : i32
      %276 = arith.addi %275, %274 : i32
      %c8_i32 = arith.constant 8 : i32
      %277 = arith.muli %276, %c8_i32 : i32
      %c0_i32_157 = arith.constant 0 : i32
      %278 = arith.addi %277, %c0_i32_157 : i32
      %279 = arith.index_cast %278 : i32 to index
      %280 = memref.load %arg2[%279] : memref<512xf32, #tpu.memory_space<smem>>
      %c1_i32_158 = arith.constant 1 : i32
      %281 = arith.addi %277, %c1_i32_158 : i32
      %282 = arith.index_cast %281 : i32 to index
      %283 = memref.load %arg2[%282] : memref<512xf32, #tpu.memory_space<smem>>
      %c2_i32 = arith.constant 2 : i32
      %284 = arith.addi %277, %c2_i32 : i32
      %285 = arith.index_cast %284 : i32 to index
      %286 = memref.load %arg2[%285] : memref<512xf32, #tpu.memory_space<smem>>
      %c3_i32 = arith.constant 3 : i32
      %287 = arith.addi %277, %c3_i32 : i32
      %288 = arith.index_cast %287 : i32 to index
      %289 = memref.load %arg2[%288] : memref<512xf32, #tpu.memory_space<smem>>
      %c4_i32 = arith.constant 4 : i32
      %290 = arith.addi %277, %c4_i32 : i32
      %291 = arith.index_cast %290 : i32 to index
      %292 = memref.load %arg2[%291] : memref<512xf32, #tpu.memory_space<smem>>
      %293 = vector.broadcast %286 : f32 to vector<8x128xf32>
      %294 = arith.minimumf %53, %293 : vector<8x128xf32>
      %295 = vector.broadcast %280 : f32 to vector<8x128xf32>
      %296 = arith.maximumf %50, %295 : vector<8x128xf32>
      %297 = arith.subf %294, %296 : vector<8x128xf32>
      %cst_159 = arith.constant 0.000000e+00 : f32
      %298 = vector.broadcast %cst_159 : f32 to vector<8x128xf32>
      %299 = arith.maximumf %297, %298 : vector<8x128xf32>
      %300 = vector.broadcast %289 : f32 to vector<8x128xf32>
      %301 = arith.minimumf %59, %300 : vector<8x128xf32>
      %302 = vector.broadcast %283 : f32 to vector<8x128xf32>
      %303 = arith.maximumf %56, %302 : vector<8x128xf32>
      %304 = arith.subf %301, %303 : vector<8x128xf32>
      %cst_160 = arith.constant 0.000000e+00 : f32
      %305 = vector.broadcast %cst_160 : f32 to vector<8x128xf32>
      %306 = arith.maximumf %304, %305 : vector<8x128xf32>
      %307 = arith.mulf %299, %306 : vector<8x128xf32>
      %308 = vector.broadcast %292 : f32 to vector<8x128xf32>
      %309 = arith.addf %60, %308 : vector<8x128xf32>
      %310 = arith.subf %309, %307 : vector<8x128xf32>
      %cst_161 = arith.constant 5.000000e-01 : f32
      %311 = vector.broadcast %cst_161 : f32 to vector<8x128xf32>
      %312 = arith.mulf %311, %310 : vector<8x128xf32>
      %313 = arith.cmpf ogt, %307, %312 : vector<8x128xf32>
      %314 = arith.extui %313 : vector<8x128xi1> to vector<8x128xi32>
      %315 = arith.sitofp %314 : vector<8x128xi32> to vector<8x128xf32>
      %c0_162 = arith.constant 0 : index
      %c0_163 = arith.constant 0 : index
      %316 = vector.load %arg9[%c0_162, %c0_163] : memref<8x128xf32, #tpu.memory_space<vmem>>, vector<8x128xf32>
      %317 = arith.maximumf %316, %315 : vector<8x128xf32>
      %c0_164 = arith.constant 0 : index
      %c0_165 = arith.constant 0 : index
      %318 = vector.load %arg9[%c0_164, %c0_165] : memref<8x128xf32, #tpu.memory_space<vmem>>, vector<8x128xf32>
      tpu.vector_store %arg9[%c0_164, %c0_165], %317 {strides = array<i32>} : memref<8x128xf32, #tpu.memory_space<vmem>>, vector<8x128xf32>,
    }
    %c0_39 = arith.constant 0 : index
    %c0_40 = arith.constant 0 : index
    %69 = vector.load %arg9[%c0_39, %c0_40] : memref<8x128xf32, #tpu.memory_space<vmem>>, vector<8x128xf32>
    %cst_41 = arith.constant 0.000000e+00 : f32
    %70 = vector.broadcast %cst_41 : f32 to vector<8x128xf32>
    %71 = arith.cmpf ogt, %69, %70 : vector<8x128xf32>
    %c0_42 = arith.constant 0 : index
    %c0_43 = arith.constant 0 : index
    %c0_44 = arith.constant 0 : index
    %c0_45 = arith.constant 0 : index
    %72 = vector.load %arg6[%c0_42, %c0_43, %c0_44, %c0_45] : memref<1x3x8x128xf32, #tpu.memory_space<vmem>>, vector<1x1x8x128xf32>
    %73 = vector.shape_cast %72 : vector<1x1x8x128xf32> to vector<8x128xf32>
    %cst_46 = arith.constant 5.000000e-01 : f32
    %74 = vector.broadcast %cst_46 : f32 to vector<8x128xf32>
    %75 = arith.cmpf ogt, %73, %74 : vector<8x128xf32>
    %76 = arith.extui %75 : vector<8x128xi1> to vector<8x128xi32>
    %77 = arith.sitofp %76 : vector<8x128xi32> to vector<8x128xf32>
    %cst_47 = arith.constant 0.000000e+00 : f32
    %78 = vector.broadcast %cst_47 : f32 to vector<8x128xf32>
    %79 = arith.maximumf %29, %78 : vector<8x128xf32>
    %80 = arith.mulf %29, %77 : vector<8x128xf32>
    %81 = arith.subf %79, %80 : vector<8x128xf32>
    %82 = math.absf %29 : vector<8x128xf32>
    %cst_48 = arith.constant 0.000000e+00 : f32
    %83 = vector.broadcast %cst_48 : f32 to vector<8x128xf32>
    %84 = arith.subf %83, %82 : vector<8x128xf32>
    %85 = math.exp %84 : vector<8x128xf32>
    %cst_49 = arith.constant 1.000000e+00 : f32
    %86 = vector.broadcast %cst_49 : f32 to vector<8x128xf32>
    %87 = arith.addf %86, %85 : vector<8x128xf32>
    %88 = math.log %87 : vector<8x128xf32>
    %89 = arith.addf %81, %88 : vector<8x128xf32>
    %cst_50 = arith.constant dense<true> : vector<8x128xi1>
    %90 = arith.xori %75, %cst_50 : vector<8x128xi1>
    %cst_51 = arith.constant dense<true> : vector<8x128xi1>
    %91 = arith.xori %71, %cst_51 : vector<8x128xi1>
    %92 = arith.andi %90, %91 : vector<8x128xi1>
    %93 = arith.andi %13, %92 : vector<8x128xi1>
    %94 = arith.ori %75, %93 : vector<8x128xi1>
    %cst_52 = arith.constant 0.000000e+00 : f32
    %95 = vector.broadcast %cst_52 : f32 to vector<8x128xf32>
    %96 = arith.select %94, %89, %95 : vector<8x128xi1>, vector<8x128xf32>
    %97 = arith.addf %16, %96 : vector<8x128xf32>
    %98 = arith.extui %94 : vector<8x128xi1> to vector<8x128xi32>
    %99 = arith.sitofp %98 : vector<8x128xi32> to vector<8x128xf32>
    %100 = arith.addf %17, %99 : vector<8x128xf32>
    %c2_53 = arith.constant 2 : index
    %101 = memref.load %arg4[%c2_53] : memref<6xf32, #tpu.memory_space<smem>>
    %c3_54 = arith.constant 3 : index
    %102 = memref.load %arg4[%c3_54] : memref<6xf32, #tpu.memory_space<smem>>
    %c0_55 = arith.constant 0 : index
    %c5 = arith.constant 5 : index
    %c0_56 = arith.constant 0 : index
    %c0_57 = arith.constant 0 : index
    %103 = vector.load %arg5[%c0_55, %c5, %c0_56, %c0_57] : memref<1x15x8x128xf32, #tpu.memory_space<vmem>>, vector<1x1x8x128xf32>
    %104 = vector.shape_cast %103 : vector<1x1x8x128xf32> to vector<8x128xf32>
    %c0_58 = arith.constant 0 : index
    %c6 = arith.constant 6 : index
    %c0_59 = arith.constant 0 : index
    %c0_60 = arith.constant 0 : index
    %105 = vector.load %arg5[%c0_58, %c6, %c0_59, %c0_60] : memref<1x15x8x128xf32, #tpu.memory_space<vmem>>, vector<1x1x8x128xf32>
    %106 = vector.shape_cast %105 : vector<1x1x8x128xf32> to vector<8x128xf32>
    %c0_61 = arith.constant 0 : index
    %c7 = arith.constant 7 : index
    %c0_62 = arith.constant 0 : index
    %c0_63 = arith.constant 0 : index
    %107 = vector.load %arg5[%c0_61, %c7, %c0_62, %c0_63] : memref<1x15x8x128xf32, #tpu.memory_space<vmem>>, vector<1x1x8x128xf32>
    %108 = vector.shape_cast %107 : vector<1x1x8x128xf32> to vector<8x128xf32>
    %c0_64 = arith.constant 0 : index
    %c8 = arith.constant 8 : index
    %c0_65 = arith.constant 0 : index
    %c0_66 = arith.constant 0 : index
    %109 = vector.load %arg5[%c0_64, %c8, %c0_65, %c0_66] : memref<1x15x8x128xf32, #tpu.memory_space<vmem>>, vector<1x1x8x128xf32>
    %110 = vector.shape_cast %109 : vector<1x1x8x128xf32> to vector<8x128xf32>
    %c0_67 = arith.constant 0 : index
    %c9 = arith.constant 9 : index
    %c0_68 = arith.constant 0 : index
    %c0_69 = arith.constant 0 : index
    %111 = vector.load %arg5[%c0_67, %c9, %c0_68, %c0_69] : memref<1x15x8x128xf32, #tpu.memory_space<vmem>>, vector<1x1x8x128xf32>
    %112 = vector.shape_cast %111 : vector<1x1x8x128xf32> to vector<8x128xf32>
    %113 = arith.negf %104 : vector<8x128xf32>
    %114 = math.exp %113 : vector<8x128xf32>
    %cst_70 = arith.constant 1.000000e+00 : f32
    %115 = vector.broadcast %cst_70 : f32 to vector<8x128xf32>
    %116 = arith.addf %115, %114 : vector<8x128xf32>
    %117 = arith.divf %115, %116 : vector<8x128xf32>
    %118 = arith.addf %117, %1 : vector<8x128xf32>
    %119 = arith.negf %106 : vector<8x128xf32>
    %120 = math.exp %119 : vector<8x128xf32>
    %cst_71 = arith.constant 1.000000e+00 : f32
    %121 = vector.broadcast %cst_71 : f32 to vector<8x128xf32>
    %122 = arith.addf %121, %120 : vector<8x128xf32>
    %123 = arith.divf %121, %122 : vector<8x128xf32>
    %124 = arith.addf %123, %3 : vector<8x128xf32>
    %125 = math.exp %108 : vector<8x128xf32>
    %126 = vector.broadcast %101 : f32 to vector<8x128xf32>
    %127 = arith.mulf %125, %126 : vector<8x128xf32>
    %128 = math.exp %110 : vector<8x128xf32>
    %129 = vector.broadcast %102 : f32 to vector<8x128xf32>
    %130 = arith.mulf %128, %129 : vector<8x128xf32>
    %cst_72 = arith.constant 5.000000e-01 : f32
    %131 = vector.broadcast %cst_72 : f32 to vector<8x128xf32>
    %132 = arith.mulf %127, %131 : vector<8x128xf32>
    %133 = arith.subf %118, %132 : vector<8x128xf32>
    %cst_73 = arith.constant 5.000000e-01 : f32
    %134 = vector.broadcast %cst_73 : f32 to vector<8x128xf32>
    %135 = arith.mulf %127, %134 : vector<8x128xf32>
    %136 = arith.addf %118, %135 : vector<8x128xf32>
    %cst_74 = arith.constant 5.000000e-01 : f32
    %137 = vector.broadcast %cst_74 : f32 to vector<8x128xf32>
    %138 = arith.mulf %130, %137 : vector<8x128xf32>
    %139 = arith.subf %124, %138 : vector<8x128xf32>
    %cst_75 = arith.constant 5.000000e-01 : f32
    %140 = vector.broadcast %cst_75 : f32 to vector<8x128xf32>
    %141 = arith.mulf %130, %140 : vector<8x128xf32>
    %142 = arith.addf %124, %141 : vector<8x128xf32>
    %143 = arith.mulf %127, %130 : vector<8x128xf32>
    %cst_76 = arith.constant 0.000000e+00 : f32
    %144 = vector.broadcast %cst_76 : f32 to vector<8x128xf32>
    %c0_77 = arith.constant 0 : index
    %c0_78 = arith.constant 0 : index
    %145 = vector.load %arg9[%c0_77, %c0_78] : memref<8x128xf32, #tpu.memory_space<vmem>>, vector<8x128xf32>
    tpu.vector_store %arg9[%c0_77, %c0_78], %144 {strides = array<i32>} : memref<8x128xf32, #tpu.memory_space<vmem>>, vector<8x128xf32>,
    %c0_i32_79 = arith.constant 0 : i32
    %146 = arith.subi %15, %c0_i32_79 : i32
    %c1_i32_80 = arith.constant 1 : i32
    %c1_i32_81 = arith.constant 1 : i32
    %147 = arith.subi %c1_i32_80, %c1_i32_81 : i32
    %148 = arith.addi %146, %147 : i32
    %c1_i32_82 = arith.constant 1 : i32
    %149 = arith.divsi %148, %c1_i32_82 : i32
    %c1_i32_83 = arith.constant 1 : i32
    %c0_i32_84 = arith.constant 0 : i32
    %c0_i32_85 = arith.constant 0 : i32
    %150 = arith.subi %149, %c0_i32_85 : i32
    %151 = arith.addi %c0_i32_85, %150 : i32
    %c1_i32_86 = arith.constant 1 : i32
    scf.for %arg10 = %c0_i32_85 to %151 step %c1_i32_86  : i32 {
      %273 = arith.muli %arg10, %c1_i32_83 : i32
      %274 = arith.addi %c0_i32_84, %273 : i32
      %c32_i32 = arith.constant 32 : i32
      %275 = arith.muli %arg0, %c32_i32 : i32
      %276 = arith.addi %275, %274 : i32
      %c8_i32 = arith.constant 8 : i32
      %277 = arith.muli %276, %c8_i32 : i32
      %c0_i32_157 = arith.constant 0 : i32
      %278 = arith.addi %277, %c0_i32_157 : i32
      %279 = arith.index_cast %278 : i32 to index
      %280 = memref.load %arg2[%279] : memref<512xf32, #tpu.memory_space<smem>>
      %c1_i32_158 = arith.constant 1 : i32
      %281 = arith.addi %277, %c1_i32_158 : i32
      %282 = arith.index_cast %281 : i32 to index
      %283 = memref.load %arg2[%282] : memref<512xf32, #tpu.memory_space<smem>>
      %c2_i32 = arith.constant 2 : i32
      %284 = arith.addi %277, %c2_i32 : i32
      %285 = arith.index_cast %284 : i32 to index
      %286 = memref.load %arg2[%285] : memref<512xf32, #tpu.memory_space<smem>>
      %c3_i32 = arith.constant 3 : i32
      %287 = arith.addi %277, %c3_i32 : i32
      %288 = arith.index_cast %287 : i32 to index
      %289 = memref.load %arg2[%288] : memref<512xf32, #tpu.memory_space<smem>>
      %c4_i32 = arith.constant 4 : i32
      %290 = arith.addi %277, %c4_i32 : i32
      %291 = arith.index_cast %290 : i32 to index
      %292 = memref.load %arg2[%291] : memref<512xf32, #tpu.memory_space<smem>>
      %293 = vector.broadcast %286 : f32 to vector<8x128xf32>
      %294 = arith.minimumf %136, %293 : vector<8x128xf32>
      %295 = vector.broadcast %280 : f32 to vector<8x128xf32>
      %296 = arith.maximumf %133, %295 : vector<8x128xf32>
      %297 = arith.subf %294, %296 : vector<8x128xf32>
      %cst_159 = arith.constant 0.000000e+00 : f32
      %298 = vector.broadcast %cst_159 : f32 to vector<8x128xf32>
      %299 = arith.maximumf %297, %298 : vector<8x128xf32>
      %300 = vector.broadcast %289 : f32 to vector<8x128xf32>
      %301 = arith.minimumf %142, %300 : vector<8x128xf32>
      %302 = vector.broadcast %283 : f32 to vector<8x128xf32>
      %303 = arith.maximumf %139, %302 : vector<8x128xf32>
      %304 = arith.subf %301, %303 : vector<8x128xf32>
      %cst_160 = arith.constant 0.000000e+00 : f32
      %305 = vector.broadcast %cst_160 : f32 to vector<8x128xf32>
      %306 = arith.maximumf %304, %305 : vector<8x128xf32>
      %307 = arith.mulf %299, %306 : vector<8x128xf32>
      %308 = vector.broadcast %292 : f32 to vector<8x128xf32>
      %309 = arith.addf %143, %308 : vector<8x128xf32>
      %310 = arith.subf %309, %307 : vector<8x128xf32>
      %cst_161 = arith.constant 5.000000e-01 : f32
      %311 = vector.broadcast %cst_161 : f32 to vector<8x128xf32>
      %312 = arith.mulf %311, %310 : vector<8x128xf32>
      %313 = arith.cmpf ogt, %307, %312 : vector<8x128xf32>
      %314 = arith.extui %313 : vector<8x128xi1> to vector<8x128xi32>
      %315 = arith.sitofp %314 : vector<8x128xi32> to vector<8x128xf32>
      %c0_162 = arith.constant 0 : index
      %c0_163 = arith.constant 0 : index
      %316 = vector.load %arg9[%c0_162, %c0_163] : memref<8x128xf32, #tpu.memory_space<vmem>>, vector<8x128xf32>
      %317 = arith.maximumf %316, %315 : vector<8x128xf32>
      %c0_164 = arith.constant 0 : index
      %c0_165 = arith.constant 0 : index
      %318 = vector.load %arg9[%c0_164, %c0_165] : memref<8x128xf32, #tpu.memory_space<vmem>>, vector<8x128xf32>
      tpu.vector_store %arg9[%c0_164, %c0_165], %317 {strides = array<i32>} : memref<8x128xf32, #tpu.memory_space<vmem>>, vector<8x128xf32>,
    }
    %c0_87 = arith.constant 0 : index
    %c0_88 = arith.constant 0 : index
    %152 = vector.load %arg9[%c0_87, %c0_88] : memref<8x128xf32, #tpu.memory_space<vmem>>, vector<8x128xf32>
    %cst_89 = arith.constant 0.000000e+00 : f32
    %153 = vector.broadcast %cst_89 : f32 to vector<8x128xf32>
    %154 = arith.cmpf ogt, %152, %153 : vector<8x128xf32>
    %c0_90 = arith.constant 0 : index
    %c1_91 = arith.constant 1 : index
    %c0_92 = arith.constant 0 : index
    %c0_93 = arith.constant 0 : index
    %155 = vector.load %arg6[%c0_90, %c1_91, %c0_92, %c0_93] : memref<1x3x8x128xf32, #tpu.memory_space<vmem>>, vector<1x1x8x128xf32>
    %156 = vector.shape_cast %155 : vector<1x1x8x128xf32> to vector<8x128xf32>
    %cst_94 = arith.constant 5.000000e-01 : f32
    %157 = vector.broadcast %cst_94 : f32 to vector<8x128xf32>
    %158 = arith.cmpf ogt, %156, %157 : vector<8x128xf32>
    %159 = arith.extui %158 : vector<8x128xi1> to vector<8x128xi32>
    %160 = arith.sitofp %159 : vector<8x128xi32> to vector<8x128xf32>
    %cst_95 = arith.constant 0.000000e+00 : f32
    %161 = vector.broadcast %cst_95 : f32 to vector<8x128xf32>
    %162 = arith.maximumf %112, %161 : vector<8x128xf32>
    %163 = arith.mulf %112, %160 : vector<8x128xf32>
    %164 = arith.subf %162, %163 : vector<8x128xf32>
    %165 = math.absf %112 : vector<8x128xf32>
    %cst_96 = arith.constant 0.000000e+00 : f32
    %166 = vector.broadcast %cst_96 : f32 to vector<8x128xf32>
    %167 = arith.subf %166, %165 : vector<8x128xf32>
    %168 = math.exp %167 : vector<8x128xf32>
    %cst_97 = arith.constant 1.000000e+00 : f32
    %169 = vector.broadcast %cst_97 : f32 to vector<8x128xf32>
    %170 = arith.addf %169, %168 : vector<8x128xf32>
    %171 = math.log %170 : vector<8x128xf32>
    %172 = arith.addf %164, %171 : vector<8x128xf32>
    %cst_98 = arith.constant dense<true> : vector<8x128xi1>
    %173 = arith.xori %158, %cst_98 : vector<8x128xi1>
    %cst_99 = arith.constant dense<true> : vector<8x128xi1>
    %174 = arith.xori %154, %cst_99 : vector<8x128xi1>
    %175 = arith.andi %173, %174 : vector<8x128xi1>
    %176 = arith.andi %13, %175 : vector<8x128xi1>
    %177 = arith.ori %158, %176 : vector<8x128xi1>
    %cst_100 = arith.constant 0.000000e+00 : f32
    %178 = vector.broadcast %cst_100 : f32 to vector<8x128xf32>
    %179 = arith.select %177, %172, %178 : vector<8x128xi1>, vector<8x128xf32>
    %180 = arith.addf %97, %179 : vector<8x128xf32>
    %181 = arith.extui %177 : vector<8x128xi1> to vector<8x128xi32>
    %182 = arith.sitofp %181 : vector<8x128xi32> to vector<8x128xf32>
    %183 = arith.addf %100, %182 : vector<8x128xf32>
    %c4_101 = arith.constant 4 : index
    %184 = memref.load %arg4[%c4_101] : memref<6xf32, #tpu.memory_space<smem>>
    %c5_102 = arith.constant 5 : index
    %185 = memref.load %arg4[%c5_102] : memref<6xf32, #tpu.memory_space<smem>>
    %c0_103 = arith.constant 0 : index
    %c10 = arith.constant 10 : index
    %c0_104 = arith.constant 0 : index
    %c0_105 = arith.constant 0 : index
    %186 = vector.load %arg5[%c0_103, %c10, %c0_104, %c0_105] : memref<1x15x8x128xf32, #tpu.memory_space<vmem>>, vector<1x1x8x128xf32>
    %187 = vector.shape_cast %186 : vector<1x1x8x128xf32> to vector<8x128xf32>
    %c0_106 = arith.constant 0 : index
    %c11 = arith.constant 11 : index
    %c0_107 = arith.constant 0 : index
    %c0_108 = arith.constant 0 : index
    %188 = vector.load %arg5[%c0_106, %c11, %c0_107, %c0_108] : memref<1x15x8x128xf32, #tpu.memory_space<vmem>>, vector<1x1x8x128xf32>
    %189 = vector.shape_cast %188 : vector<1x1x8x128xf32> to vector<8x128xf32>
    %c0_109 = arith.constant 0 : index
    %c12 = arith.constant 12 : index
    %c0_110 = arith.constant 0 : index
    %c0_111 = arith.constant 0 : index
    %190 = vector.load %arg5[%c0_109, %c12, %c0_110, %c0_111] : memref<1x15x8x128xf32, #tpu.memory_space<vmem>>, vector<1x1x8x128xf32>
    %191 = vector.shape_cast %190 : vector<1x1x8x128xf32> to vector<8x128xf32>
    %c0_112 = arith.constant 0 : index
    %c13 = arith.constant 13 : index
    %c0_113 = arith.constant 0 : index
    %c0_114 = arith.constant 0 : index
    %192 = vector.load %arg5[%c0_112, %c13, %c0_113, %c0_114] : memref<1x15x8x128xf32, #tpu.memory_space<vmem>>, vector<1x1x8x128xf32>
    %193 = vector.shape_cast %192 : vector<1x1x8x128xf32> to vector<8x128xf32>
    %c0_115 = arith.constant 0 : index
    %c14 = arith.constant 14 : index
    %c0_116 = arith.constant 0 : index
    %c0_117 = arith.constant 0 : index
    %194 = vector.load %arg5[%c0_115, %c14, %c0_116, %c0_117] : memref<1x15x8x128xf32, #tpu.memory_space<vmem>>, vector<1x1x8x128xf32>
    %195 = vector.shape_cast %194 : vector<1x1x8x128xf32> to vector<8x128xf32>
    %196 = arith.negf %187 : vector<8x128xf32>
    %197 = math.exp %196 : vector<8x128xf32>
    %cst_118 = arith.constant 1.000000e+00 : f32
    %198 = vector.broadcast %cst_118 : f32 to vector<8x128xf32>
    %199 = arith.addf %198, %197 : vector<8x128xf32>
    %200 = arith.divf %198, %199 : vector<8x128xf32>
    %201 = arith.addf %200, %1 : vector<8x128xf32>
    %202 = arith.negf %189 : vector<8x128xf32>
    %203 = math.exp %202 : vector<8x128xf32>
    %cst_119 = arith.constant 1.000000e+00 : f32
    %204 = vector.broadcast %cst_119 : f32 to vector<8x128xf32>
    %205 = arith.addf %204, %203 : vector<8x128xf32>
    %206 = arith.divf %204, %205 : vector<8x128xf32>
    %207 = arith.addf %206, %3 : vector<8x128xf32>
    %208 = math.exp %191 : vector<8x128xf32>
    %209 = vector.broadcast %184 : f32 to vector<8x128xf32>
    %210 = arith.mulf %208, %209 : vector<8x128xf32>
    %211 = math.exp %193 : vector<8x128xf32>
    %212 = vector.broadcast %185 : f32 to vector<8x128xf32>
    %213 = arith.mulf %211, %212 : vector<8x128xf32>
    %cst_120 = arith.constant 5.000000e-01 : f32
    %214 = vector.broadcast %cst_120 : f32 to vector<8x128xf32>
    %215 = arith.mulf %210, %214 : vector<8x128xf32>
    %216 = arith.subf %201, %215 : vector<8x128xf32>
    %cst_121 = arith.constant 5.000000e-01 : f32
    %217 = vector.broadcast %cst_121 : f32 to vector<8x128xf32>
    %218 = arith.mulf %210, %217 : vector<8x128xf32>
    %219 = arith.addf %201, %218 : vector<8x128xf32>
    %cst_122 = arith.constant 5.000000e-01 : f32
    %220 = vector.broadcast %cst_122 : f32 to vector<8x128xf32>
    %221 = arith.mulf %213, %220 : vector<8x128xf32>
    %222 = arith.subf %207, %221 : vector<8x128xf32>
    %cst_123 = arith.constant 5.000000e-01 : f32
    %223 = vector.broadcast %cst_123 : f32 to vector<8x128xf32>
    %224 = arith.mulf %213, %223 : vector<8x128xf32>
    %225 = arith.addf %207, %224 : vector<8x128xf32>
    %226 = arith.mulf %210, %213 : vector<8x128xf32>
    %cst_124 = arith.constant 0.000000e+00 : f32
    %227 = vector.broadcast %cst_124 : f32 to vector<8x128xf32>
    %c0_125 = arith.constant 0 : index
    %c0_126 = arith.constant 0 : index
    %228 = vector.load %arg9[%c0_125, %c0_126] : memref<8x128xf32, #tpu.memory_space<vmem>>, vector<8x128xf32>
    tpu.vector_store %arg9[%c0_125, %c0_126], %227 {strides = array<i32>} : memref<8x128xf32, #tpu.memory_space<vmem>>, vector<8x128xf32>,
    %c0_i32_127 = arith.constant 0 : i32
    %229 = arith.subi %15, %c0_i32_127 : i32
    %c1_i32_128 = arith.constant 1 : i32
    %c1_i32_129 = arith.constant 1 : i32
    %230 = arith.subi %c1_i32_128, %c1_i32_129 : i32
    %231 = arith.addi %229, %230 : i32
    %c1_i32_130 = arith.constant 1 : i32
    %232 = arith.divsi %231, %c1_i32_130 : i32
    %c1_i32_131 = arith.constant 1 : i32
    %c0_i32_132 = arith.constant 0 : i32
    %c0_i32_133 = arith.constant 0 : i32
    %233 = arith.subi %232, %c0_i32_133 : i32
    %234 = arith.addi %c0_i32_133, %233 : i32
    %c1_i32_134 = arith.constant 1 : i32
    scf.for %arg10 = %c0_i32_133 to %234 step %c1_i32_134  : i32 {
      %273 = arith.muli %arg10, %c1_i32_131 : i32
      %274 = arith.addi %c0_i32_132, %273 : i32
      %c32_i32 = arith.constant 32 : i32
      %275 = arith.muli %arg0, %c32_i32 : i32
      %276 = arith.addi %275, %274 : i32
      %c8_i32 = arith.constant 8 : i32
      %277 = arith.muli %276, %c8_i32 : i32
      %c0_i32_157 = arith.constant 0 : i32
      %278 = arith.addi %277, %c0_i32_157 : i32
      %279 = arith.index_cast %278 : i32 to index
      %280 = memref.load %arg2[%279] : memref<512xf32, #tpu.memory_space<smem>>
      %c1_i32_158 = arith.constant 1 : i32
      %281 = arith.addi %277, %c1_i32_158 : i32
      %282 = arith.index_cast %281 : i32 to index
      %283 = memref.load %arg2[%282] : memref<512xf32, #tpu.memory_space<smem>>
      %c2_i32 = arith.constant 2 : i32
      %284 = arith.addi %277, %c2_i32 : i32
      %285 = arith.index_cast %284 : i32 to index
      %286 = memref.load %arg2[%285] : memref<512xf32, #tpu.memory_space<smem>>
      %c3_i32 = arith.constant 3 : i32
      %287 = arith.addi %277, %c3_i32 : i32
      %288 = arith.index_cast %287 : i32 to index
      %289 = memref.load %arg2[%288] : memref<512xf32, #tpu.memory_space<smem>>
      %c4_i32 = arith.constant 4 : i32
      %290 = arith.addi %277, %c4_i32 : i32
      %291 = arith.index_cast %290 : i32 to index
      %292 = memref.load %arg2[%291] : memref<512xf32, #tpu.memory_space<smem>>
      %293 = vector.broadcast %286 : f32 to vector<8x128xf32>
      %294 = arith.minimumf %219, %293 : vector<8x128xf32>
      %295 = vector.broadcast %280 : f32 to vector<8x128xf32>
      %296 = arith.maximumf %216, %295 : vector<8x128xf32>
      %297 = arith.subf %294, %296 : vector<8x128xf32>
      %cst_159 = arith.constant 0.000000e+00 : f32
      %298 = vector.broadcast %cst_159 : f32 to vector<8x128xf32>
      %299 = arith.maximumf %297, %298 : vector<8x128xf32>
      %300 = vector.broadcast %289 : f32 to vector<8x128xf32>
      %301 = arith.minimumf %225, %300 : vector<8x128xf32>
      %302 = vector.broadcast %283 : f32 to vector<8x128xf32>
      %303 = arith.maximumf %222, %302 : vector<8x128xf32>
      %304 = arith.subf %301, %303 : vector<8x128xf32>
      %cst_160 = arith.constant 0.000000e+00 : f32
      %305 = vector.broadcast %cst_160 : f32 to vector<8x128xf32>
      %306 = arith.maximumf %304, %305 : vector<8x128xf32>
      %307 = arith.mulf %299, %306 : vector<8x128xf32>
      %308 = vector.broadcast %292 : f32 to vector<8x128xf32>
      %309 = arith.addf %226, %308 : vector<8x128xf32>
      %310 = arith.subf %309, %307 : vector<8x128xf32>
      %cst_161 = arith.constant 5.000000e-01 : f32
      %311 = vector.broadcast %cst_161 : f32 to vector<8x128xf32>
      %312 = arith.mulf %311, %310 : vector<8x128xf32>
      %313 = arith.cmpf ogt, %307, %312 : vector<8x128xf32>
      %314 = arith.extui %313 : vector<8x128xi1> to vector<8x128xi32>
      %315 = arith.sitofp %314 : vector<8x128xi32> to vector<8x128xf32>
      %c0_162 = arith.constant 0 : index
      %c0_163 = arith.constant 0 : index
      %316 = vector.load %arg9[%c0_162, %c0_163] : memref<8x128xf32, #tpu.memory_space<vmem>>, vector<8x128xf32>
      %317 = arith.maximumf %316, %315 : vector<8x128xf32>
      %c0_164 = arith.constant 0 : index
      %c0_165 = arith.constant 0 : index
      %318 = vector.load %arg9[%c0_164, %c0_165] : memref<8x128xf32, #tpu.memory_space<vmem>>, vector<8x128xf32>
      tpu.vector_store %arg9[%c0_164, %c0_165], %317 {strides = array<i32>} : memref<8x128xf32, #tpu.memory_space<vmem>>, vector<8x128xf32>,
    }
    %c0_135 = arith.constant 0 : index
    %c0_136 = arith.constant 0 : index
    %235 = vector.load %arg9[%c0_135, %c0_136] : memref<8x128xf32, #tpu.memory_space<vmem>>, vector<8x128xf32>
    %cst_137 = arith.constant 0.000000e+00 : f32
    %236 = vector.broadcast %cst_137 : f32 to vector<8x128xf32>
    %237 = arith.cmpf ogt, %235, %236 : vector<8x128xf32>
    %c0_138 = arith.constant 0 : index
    %c2_139 = arith.constant 2 : index
    %c0_140 = arith.constant 0 : index
    %c0_141 = arith.constant 0 : index
    %238 = vector.load %arg6[%c0_138, %c2_139, %c0_140, %c0_141] : memref<1x3x8x128xf32, #tpu.memory_space<vmem>>, vector<1x1x8x128xf32>
    %239 = vector.shape_cast %238 : vector<1x1x8x128xf32> to vector<8x128xf32>
    %cst_142 = arith.constant 5.000000e-01 : f32
    %240 = vector.broadcast %cst_142 : f32 to vector<8x128xf32>
    %241 = arith.cmpf ogt, %239, %240 : vector<8x128xf32>
    %242 = arith.extui %241 : vector<8x128xi1> to vector<8x128xi32>
    %243 = arith.sitofp %242 : vector<8x128xi32> to vector<8x128xf32>
    %cst_143 = arith.constant 0.000000e+00 : f32
    %244 = vector.broadcast %cst_143 : f32 to vector<8x128xf32>
    %245 = arith.maximumf %195, %244 : vector<8x128xf32>
    %246 = arith.mulf %195, %243 : vector<8x128xf32>
    %247 = arith.subf %245, %246 : vector<8x128xf32>
    %248 = math.absf %195 : vector<8x128xf32>
    %cst_144 = arith.constant 0.000000e+00 : f32
    %249 = vector.broadcast %cst_144 : f32 to vector<8x128xf32>
    %250 = arith.subf %249, %248 : vector<8x128xf32>
    %251 = math.exp %250 : vector<8x128xf32>
    %cst_145 = arith.constant 1.000000e+00 : f32
    %252 = vector.broadcast %cst_145 : f32 to vector<8x128xf32>
    %253 = arith.addf %252, %251 : vector<8x128xf32>
    %254 = math.log %253 : vector<8x128xf32>
    %255 = arith.addf %247, %254 : vector<8x128xf32>
    %cst_146 = arith.constant dense<true> : vector<8x128xi1>
    %256 = arith.xori %241, %cst_146 : vector<8x128xi1>
    %cst_147 = arith.constant dense<true> : vector<8x128xi1>
    %257 = arith.xori %237, %cst_147 : vector<8x128xi1>
    %258 = arith.andi %256, %257 : vector<8x128xi1>
    %259 = arith.andi %13, %258 : vector<8x128xi1>
    %260 = arith.ori %241, %259 : vector<8x128xi1>
    %cst_148 = arith.constant 0.000000e+00 : f32
    %261 = vector.broadcast %cst_148 : f32 to vector<8x128xf32>
    %262 = arith.select %260, %255, %261 : vector<8x128xi1>, vector<8x128xf32>
    %263 = arith.addf %180, %262 : vector<8x128xf32>
    %264 = arith.extui %260 : vector<8x128xi1> to vector<8x128xi32>
    %265 = arith.sitofp %264 : vector<8x128xi32> to vector<8x128xf32>
    %266 = arith.addf %183, %265 : vector<8x128xf32>
    %c0_149 = arith.constant 0 : index
    %c0_150 = arith.constant 0 : index
    %c0_151 = arith.constant 0 : index
    %c0_152 = arith.constant 0 : index
    %267 = vector.load %arg8[%c0_149, %c0_150, %c0_151, %c0_152] : memref<1x2x8x128xf32, #tpu.memory_space<vmem>>, vector<1x1x8x128xf32>
    %268 = vector.shape_cast %267 : vector<1x1x8x128xf32> to vector<8x128xf32>
    %269 = vector.shape_cast %263 : vector<8x128xf32> to vector<1x1x8x128xf32>
    tpu.vector_store %arg8[%c0_149, %c0_150, %c0_151, %c0_152], %269 {strides = array<i32>} : memref<1x2x8x128xf32, #tpu.memory_space<vmem>>, vector<1x1x8x128xf32>,
    %c0_153 = arith.constant 0 : index
    %c1_154 = arith.constant 1 : index
    %c0_155 = arith.constant 0 : index
    %c0_156 = arith.constant 0 : index
    %270 = vector.load %arg8[%c0_153, %c1_154, %c0_155, %c0_156] : memref<1x2x8x128xf32, #tpu.memory_space<vmem>>, vector<1x1x8x128xf32>
    %271 = vector.shape_cast %270 : vector<1x1x8x128xf32> to vector<8x128xf32>
    %272 = vector.shape_cast %266 : vector<8x128xf32> to vector<1x1x8x128xf32>
    tpu.vector_store %arg8[%c0_153, %c1_154, %c0_155, %c0_156], %272 {strides = array<i32>} : memref<1x2x8x128xf32, #tpu.memory_space<vmem>>, vector<1x1x8x128xf32>,
    return
  }
  func.func @transform_0(%arg0: i32, %arg1: i32) -> i32 {
    %c0_i32 = arith.constant 0 : i32
    %c0_i32_0 = arith.constant 0 : i32
    return %c0_i32 : i32
  }
  func.func @transform_1(%arg0: i32, %arg1: i32) -> i32 {
    %c0_i32 = arith.constant 0 : i32
    %c0_i32_0 = arith.constant 0 : i32
    return %c0_i32 : i32
  }
  func.func @transform_2(%arg0: i32, %arg1: i32) -> i32 {
    %c0_i32 = arith.constant 0 : i32
    %c0_i32_0 = arith.constant 0 : i32
    return %c0_i32 : i32
  }
  func.func @transform_3(%arg0: i32, %arg1: i32) -> (i32, i32, i32, i32) {
    %c0_i32 = arith.constant 0 : i32
    %c0_i32_0 = arith.constant 0 : i32
    %c0_i32_1 = arith.constant 0 : i32
    return %arg0, %c0_i32, %arg1, %c0_i32_0 : i32, i32, i32, i32
  }
  func.func @transform_4(%arg0: i32, %arg1: i32) -> (i32, i32, i32, i32) {
    %c0_i32 = arith.constant 0 : i32
    %c0_i32_0 = arith.constant 0 : i32
    %c0_i32_1 = arith.constant 0 : i32
    return %arg0, %c0_i32, %arg1, %c0_i32_0 : i32, i32, i32, i32
  }
  func.func @transform_5(%arg0: i32, %arg1: i32) -> (i32, i32, i32) {
    %c0_i32 = arith.constant 0 : i32
    %c0_i32_0 = arith.constant 0 : i32
    %c0_i32_1 = arith.constant 0 : i32
    return %c0_i32, %arg1, %c0_i32_0 : i32, i32, i32
  }
  func.func @transform_6(%arg0: i32, %arg1: i32) -> (i32, i32, i32, i32) {
    %c1_i32 = arith.constant 1 : i32
    %0 = arith.muli %arg0, %c1_i32 : i32
    %1 = arith.addi %0, %arg1 : i32
    %c0_i32 = arith.constant 0 : i32
    %c0_i32_0 = arith.constant 0 : i32
    %c0_i32_1 = arith.constant 0 : i32
    %c0_i32_2 = arith.constant 0 : i32
    return %1, %c0_i32, %c0_i32_0, %c0_i32_1 : i32, i32, i32, i32
  }
}

</mosaic_0001>

<llo_original>
// kernel: tpu_custom_call.1
$region0: #{tpu_custom_call.1}
  #allocation0 [shape = 'u32[]', space=smem, size = 0x4, offset = 0x4, fixed_abs, tag = 'smem constant byte address 0x4 - core index']
  #allocation1 [shape = 'u32[144,128]{1,0:T(1,128)}', space=vmem, size = 0x12000, scoped, tag = 'internal scratch']
  #allocation2 [shape = 'f32[8,128]{1,0:T(8,128)}', space=vmem, size = 0x1000, scoped, tag = 'scratch operand']
  %s0 = inlined_call_operand.hbm [shape: f32[512], index: 0, kind: input, shape index: {}]
  %s1 = inlined_call_operand.vmem [shape: s32[2], index: 1, kind: input, shape index: {}]
  %s2 = inlined_call_operand.vmem [shape: f32[6], index: 2, kind: input, shape index: {}]
  %s3 = inlined_call_operand.hbm [shape: f32[2,15,8,128], index: 3, kind: input, shape index: {}]
  %s4 = inlined_call_operand.hbm [shape: f32[2,3,8,128], index: 4, kind: input, shape index: {}]
  %s5 = inlined_call_operand.vmem [shape: f32[2,8,128], index: 5, kind: input, shape index: {}]
  %s6 = inlined_call_operand.hbm [shape: f32[2,2,8,128], index: 6, kind: output, shape index: {}]
  %s7 = sld [smem:[#allocation0]]
  $region98: #{tpu_custom_call.1} parent=0
    _
  %s9 = ssub.s32 1, %s7
  %s10 = scalar_select 0, %s9, %s7
  $region1: #{tpu_custom_call.1} parent=0
    #allocation3 [shape = 'u8[2048]{0}', space=smem, size = 0x800, scoped, tag = 'input window, operand 0, single buffered']
    #allocation4 [shape = 's32[2]{0}', space=sflag, size = 0x8, scoped, tag = 'scoped memory for tpu_custom_call.1']
    #allocation5 [shape = 's32[2]{0}', space=sflag, size = 0x8, scoped, tag = 'scoped memory for tpu_custom_call.1']
    #allocation6 [shape = 's32[2]{0}', space=sflag, size = 0x8, scoped, tag = 'scoped memory for tpu_custom_call.1']
    #allocation7 [shape = 's32[2]{0}', space=sflag, size = 0x8, scoped, tag = 'scoped memory for tpu_custom_call.1']
    #allocation8 [shape = 'u8[512]{0}', space=smem, size = 0x200, scoped, tag = 'input window, operand 1, single buffered']
    #allocation9 [shape = 'u8[512]{0}', space=smem, size = 0x200, scoped, tag = 'input window, operand 2, single buffered']
    #allocation10 [shape = 's32[1]{0}', space=sflag, size = 0x4, scoped, tag = 'scoped memory for tpu_custom_call.1']
    #allocation11 [shape = 'u8[122880]{0}', space=vmem, size = 0x1e000, scoped, tag = 'input window, operand 3']
    #allocation12 [shape = 'u8[24576]{0}', space=vmem, size = 0x6000, scoped, tag = 'input window, operand 4']
    #allocation13 [shape = 's32[2]{0}', space=sflag, size = 0x8, scoped, tag = 'scoped memory for tpu_custom_call.1']
    #allocation14 [shape = 'u8[16384]{0}', space=vmem, size = 0x4000, scoped, tag = 'output window, operand 0']
    %11 = vsyncpa [#allocation6], 0
    %12 = vsyncpa [#allocation7], 0
    %13 = vsyncpa [#allocation10], 0
    %14 = vsyncpa [#allocation4], 0
    %s15 = scalar_lea.sflag [#allocation4], 1
    %16 = vsyncpa %s15, 0
    %17 = vsyncpa [#allocation13], 0
    %s18 = scalar_lea.sflag [#allocation13], 1
    %19 = vsyncpa %s18, 0
    %20 = vsyncpa [#allocation5], 0
    %s21 = scalar_lea.sflag [#allocation5], 1
    %22 = vsyncpa %s21, 0
    loop: start=0, step=1, limit=4
    $region2: #{tpu_custom_call.1} parent=1 // loop_pre_header
      _
    $region3: #{tpu_custom_call.1} parent=1 // loop_header
      %s24 = sphi 0, %s28
      %p25 = scmp.ge.s32.totalorder %s24, 4
      %s31 = sphi 0, %s43
      %s32 = sphi 0, %s39
      %s33 = sphi 0, %s31
      %s34 = sphi 0, %s32
      %s35 = sphi 0, %s33
      %s36 = sphi 0, %s34
      %s44 = sphi 0, %s44
      %s46 = sphi 0, %s44
      %s47 = sphi 0, %s46
      %s61 = sphi 0, %s47
      %s65 = sphi 0, %s65
      %s67 = sphi 0, %s65
      %s68 = sphi 0, %s67
      %s82 = sphi 0, %s68
      %s86 = sphi 0, %s86
      %s88 = sphi 0, %s86
      %s89 = sphi 0, %s88
      %s103 = sphi 0, %s89
      %s111 = sphi 0, %s113
      %s114 = sphi 0, %s111
      %s115 = sphi 0, %s114
      %s131 = sphi 0, %s115
      %s139 = sphi 0, %s141
      %s142 = sphi 0, %s139
      %s143 = sphi 0, %s142
      %s159 = sphi 0, %s143
      %s165 = sphi 0, %s167
      %s168 = sphi 0, %s165
      %s169 = sphi 0, %s168
      %s185 = sphi 0, %s169
      %s193 = sphi 0, %s195
      %s196 = sphi 0, %s193
      %s197 = sphi 0, %s196
      %s213 = sphi 0, %s197
    $region4: #{tpu_custom_call.1} parent=1 // loop_header_branch
      %27 = sbr.rel (%p25) target = $region8
    $region5: #{tpu_custom_call.1} parent=1 // loop_body
      %s29 = ssub.s32 %s24, 1
      %s30 = ssub.s32 %s24, 2
      %s37 = sadd.s32 1, %s32
      %p38 = scmp.ge.s32.totalorder %s37, 1
      %s39 = scalar_select %p38, 0, %s37
      %s40 = sadd.s32 1, %s31
      %s41 = scalar_select %p38, %s40, %s31
      %p42 = scmp.ge.s32.totalorder %s41, 2
      %s43 = scalar_select %p42, 0, %s41
      %s45 = sadd.s32 %s44, 1
      %p48 = scmp.eq.s32.totalorder %s24, 1
      %p49 = scmp.ne.s32.totalorder %s44, %s46
      %p50 = scmp.eq.s32.totalorder %s24, 0
      %p51 = por %p49, %p50
      %p52 = scmp.ne.s32.totalorder %s44, %s46
      %p53 = scmp.eq.s32.totalorder %s29, 1
      %p54 = por %p52, %p53
      %p55 = scmp.ne.s32.totalorder %s46, %s47
      %p56 = scmp.eq.s32.totalorder %s29, 0
      %p57 = por %p55, %p56
      %p58 = scmp.ne.s32.totalorder %s46, %s47
      %p59 = scmp.eq.s32.totalorder %s30, 1
      %p60 = por %p58, %p59
      %p62 = scmp.ne.s32.totalorder %s47, %s61
      %p63 = scmp.eq.s32.totalorder %s30, 0
      %p64 = por %p62, %p63
      %s66 = sadd.s32 %s65, 1
      %p69 = scmp.eq.s32.totalorder %s24, 1
      %p70 = scmp.ne.s32.totalorder %s65, %s67
      %p71 = scmp.eq.s32.totalorder %s24, 0
      %p72 = por %p70, %p71
      %p73 = scmp.ne.s32.totalorder %s65, %s67
      %p74 = scmp.eq.s32.totalorder %s29, 1
      %p75 = por %p73, %p74
      %p76 = scmp.ne.s32.totalorder %s67, %s68
      %p77 = scmp.eq.s32.totalorder %s29, 0
      %p78 = por %p76, %p77
      %p79 = scmp.ne.s32.totalorder %s67, %s68
      %p80 = scmp.eq.s32.totalorder %s30, 1
      %p81 = por %p79, %p80
      %p83 = scmp.ne.s32.totalorder %s68, %s82
      %p84 = scmp.eq.s32.totalorder %s30, 0
      %p85 = por %p83, %p84
      %s87 = sadd.s32 %s86, 1
      %p90 = scmp.eq.s32.totalorder %s24, 1
      %p91 = scmp.ne.s32.totalorder %s86, %s88
      %p92 = scmp.eq.s32.totalorder %s24, 0
      %p93 = por %p91, %p92
      %p94 = scmp.ne.s32.totalorder %s86, %s88
      %p95 = scmp.eq.s32.totalorder %s29, 1
      %p96 = por %p94, %p95
      %p97 = scmp.ne.s32.totalorder %s88, %s89
      %p98 = scmp.eq.s32.totalorder %s29, 0
      %p99 = por %p97, %p98
      %p100 = scmp.ne.s32.totalorder %s88, %s89
      %p101 = scmp.eq.s32.totalorder %s30, 1
      %p102 = por %p100, %p101
      %p104 = scmp.ne.s32.totalorder %s89, %s103
      %p105 = scmp.eq.s32.totalorder %s30, 0
      %p106 = por %p104, %p105
      %s107 = ssub.s32 %s31, %s43
      %s108 = ssub.s32 %s32, %s39
      %s109 = sor.u32 %s107, %s108
      %p110 = scmp.eq.s32.totalorder %s109, 0
      %s112 = sadd.s32 %s111, 1
      %s113 = scalar_select %p110, %s111, %s112
      %p116 = pneg %p110
      %p117 = scmp.eq.s32.totalorder %s24, 1
      %p118 = por %p116, %p117
      %p119 = scmp.ne.s32.totalorder %s111, %s114
      %p120 = scmp.eq.s32.totalorder %s24, 0
      %p121 = por %p119, %p120
      %p122 = scmp.ne.s32.totalorder %s111, %s114
      %p123 = scmp.eq.s32.totalorder %s29, 1
      %p124 = por %p122, %p123
      %p125 = scmp.ne.s32.totalorder %s114, %s115
      %p126 = scmp.eq.s32.totalorder %s29, 0
      %p127 = por %p125, %p126
      %p128 = scmp.ne.s32.totalorder %s114, %s115
      %p129 = scmp.eq.s32.totalorder %s30, 1
      %p130 = por %p128, %p129
      %p132 = scmp.ne.s32.totalorder %s115, %s131
      %p133 = scmp.eq.s32.totalorder %s30, 0
      %p134 = por %p132, %p133
      %s135 = ssub.s32 %s31, %s43
      %s136 = ssub.s32 %s32, %s39
      %s137 = sor.u32 %s135, %s136
      %p138 = scmp.eq.s32.totalorder %s137, 0
      %s140 = sadd.s32 %s139, 1
      %s141 = scalar_select %p138, %s139, %s140
      %p144 = pneg %p138
      %p145 = scmp.eq.s32.totalorder %s24, 1
      %p146 = por %p144, %p145
      %p147 = scmp.ne.s32.totalorder %s139, %s142
      %p148 = scmp.eq.s32.totalorder %s24, 0
      %p149 = por %p147, %p148
      %p150 = scmp.ne.s32.totalorder %s139, %s142
      %p151 = scmp.eq.s32.totalorder %s29, 1
      %p152 = por %p150, %p151
      %p153 = scmp.ne.s32.totalorder %s142, %s143
      %p154 = scmp.eq.s32.totalorder %s29, 0
      %p155 = por %p153, %p154
      %p156 = scmp.ne.s32.totalorder %s142, %s143
      %p157 = scmp.eq.s32.totalorder %s30, 1
      %p158 = por %p156, %p157
      %p160 = scmp.ne.s32.totalorder %s143, %s159
      %p161 = scmp.eq.s32.totalorder %s30, 0
      %p162 = por %p160, %p161
      %s163 = ssub.s32 %s32, %s39
      %p164 = scmp.eq.s32.totalorder %s163, 0
      %s166 = sadd.s32 %s165, 1
      %s167 = scalar_select %p164, %s165, %s166
      %p170 = pneg %p164
      %p171 = scmp.eq.s32.totalorder %s24, 1
      %p172 = por %p170, %p171
      %p173 = scmp.ne.s32.totalorder %s165, %s168
      %p174 = scmp.eq.s32.totalorder %s24, 0
      %p175 = por %p173, %p174
      %p176 = scmp.ne.s32.totalorder %s165, %s168
      %p177 = scmp.eq.s32.totalorder %s29, 1
      %p178 = por %p176, %p177
      %p179 = scmp.ne.s32.totalorder %s168, %s169
      %p180 = scmp.eq.s32.totalorder %s29, 0
      %p181 = por %p179, %p180
      %p182 = scmp.ne.s32.totalorder %s168, %s169
      %p183 = scmp.eq.s32.totalorder %s30, 1
      %p184 = por %p182, %p183
      %p186 = scmp.ne.s32.totalorder %s169, %s185
      %p187 = scmp.eq.s32.totalorder %s30, 0
      %p188 = por %p186, %p187
      %s189 = sadd.s32 %s31, %s32
      %s190 = sadd.s32 %s43, %s39
      %s191 = ssub.s32 %s189, %s190
      %p192 = scmp.eq.s32.totalorder %s191, 0
      %s194 = sadd.s32 %s193, 1
      %s195 = scalar_select %p192, %s193, %s194
      %p198 = pneg %p192
      %p199 = scmp.eq.s32.totalorder %s24, 1
      %p200 = por %p198, %p199
      %p201 = scmp.ne.s32.totalorder %s193, %s196
      %p202 = scmp.eq.s32.totalorder %s24, 0
      %p203 = por %p201, %p202
      %p204 = scmp.ne.s32.totalorder %s193, %s196
      %p205 = scmp.eq.s32.totalorder %s29, 1
      %p206 = por %p204, %p205
      %p207 = scmp.ne.s32.totalorder %s196, %s197
      %p208 = scmp.eq.s32.totalorder %s29, 0
      %p209 = por %p207, %p208
      %p210 = scmp.ne.s32.totalorder %s196, %s197
      %p211 = scmp.eq.s32.totalorder %s30, 1
      %p212 = por %p210, %p211
      %p214 = scmp.ne.s32.totalorder %s197, %s213
      %p215 = scmp.eq.s32.totalorder %s30, 0
      %p216 = por %p214, %p215
      %p217 = scmp.le.s32.totalorder 1, %s24
      %p218 = scmp.lt.s32.totalorder %s24, 3
      %p219 = pnand %p217, %p218
      %p220 = pneg %p219
      // Predicated region
      $region9: #{tpu_custom_call.1} parent=5 // pred_check
        _
      $region10: #{tpu_custom_call.1} parent=5 // pred_check_branch
        %222 = sbr.rel (%p219) target = $region12
      $region11: #{tpu_custom_call.1} parent=5 // pred_region
        %s223 = ssub.s32 %s24, 1
        // Predicated region
        $region13: #{tpu_custom_call.1} parent=11 // pred_check
          %p224 = pneg %p57
        $region14: #{tpu_custom_call.1} parent=11 // pred_check_branch
          %226 = sbr.rel (%p224) target = $region16
        $region15: #{tpu_custom_call.1} parent=11 // pred_region
          %s228 = ssub.s32 64, 64
          %229 = vsyncadd [#allocation6], %s228
          %232 = dma.hbm_to_smem %s0, 64, [#allocation3], [#allocation6]
        $region16: #{tpu_custom_call.1} parent=11 // pred_fallthru
          _
        // Predicated region
        $region17: #{tpu_custom_call.1} parent=11 // pred_check
          %p233 = pneg %p78
        $region18: #{tpu_custom_call.1} parent=11 // pred_check_branch
          %235 = sbr.rel (%p233) target = $region20
        $region19: #{tpu_custom_call.1} parent=11 // pred_region
          %s237 = ssub.s32 16, 16
          %238 = vsyncadd [#allocation7], %s237
          %s240 = sshll.u32 %s1, 4
          %s241 = int_to_ptr.vmem [resolvable:$true] %s240
          %243 = dma.vmem_to_smem %s241, 16, [#allocation8], [#allocation7]
        $region20: #{tpu_custom_call.1} parent=11 // pred_fallthru
          _
        // Predicated region
        $region21: #{tpu_custom_call.1} parent=11 // pred_check
          %p244 = pneg %p99
        $region22: #{tpu_custom_call.1} parent=11 // pred_check_branch
          %246 = sbr.rel (%p244) target = $region24
        $region23: #{tpu_custom_call.1} parent=11 // pred_region
          %s248 = ssub.s32 16, 16
          %249 = vsyncadd [#allocation10], %s248
          %s251 = sshll.u32 %s2, 4
          %s252 = int_to_ptr.vmem [resolvable:$true] %s251
          %254 = dma.vmem_to_smem %s252, 16, [#allocation9], [#allocation10]
        $region24: #{tpu_custom_call.1} parent=11 // pred_fallthru
          _
        // Predicated region
        $region25: #{tpu_custom_call.1} parent=11 // pred_check
          %p255 = pneg %p181
        $region26: #{tpu_custom_call.1} parent=11 // pred_check_branch
          %257 = sbr.rel (%p255) target = $region28
        $region27: #{tpu_custom_call.1} parent=11 // pred_region
          %p258 = scmp.lt.s32.totalorder %s34, 0
          %s259 = scalar_select %p258, %s34, 0
          %s260 = smul.addr %s259, 8
          %s261 = scalar_lea.vmem %s5, %s260
        $region28: #{tpu_custom_call.1} parent=11 // pred_fallthru
          _
      $region12: #{tpu_custom_call.1} parent=5 // pred_fallthru
        _
      %p262 = scmp.lt.s32.totalorder %s24, 2
      // Predicated region
      $region29: #{tpu_custom_call.1} parent=5 // pred_check
        %p263 = pneg %p262
      $region30: #{tpu_custom_call.1} parent=5 // pred_check_branch
        %265 = sbr.rel (%p263) target = $region32
      $region31: #{tpu_custom_call.1} parent=5 // pred_region
        // Predicated region
        $region33: #{tpu_custom_call.1} parent=31 // pred_check
          %p266 = pneg %p121
        $region34: #{tpu_custom_call.1} parent=31 // pred_check_branch
          %268 = sbr.rel (%p266) target = $region36
        $region35: #{tpu_custom_call.1} parent=31 // pred_region
          %s269 = sand.u32 %s111, 1
          %s270 = scalar_lea.sflag [#allocation4], %s269
          %s271 = sand.u32 %s111, 1
          %s272 = smul.addr %s271, 120
          %s273 = scalar_lea.vmem [#allocation11], %s272
          %s275 = ssub.s32 1920, 1920
          %276 = vsyncadd %s270, %s275
          %s277 = smul.addr %s31, 15
          %s278 = sadd.s32 %s32, %s277
          %s279 = smul.addr %s278, 128
          %s280 = scalar_lea.hbm %s3, %s279
          %s281 = sshll.u32 %s273, 4
          %s282 = int_to_ptr.vmem [resolvable:$true] %s281
          %287 = dma.hbm_to_vmem [thread:$0]  %s280, 1920, %s282, %s270, 128, 128, 8
        $region36: #{tpu_custom_call.1} parent=31 // pred_fallthru
          _
        // Predicated region
        $region37: #{tpu_custom_call.1} parent=31 // pred_check
          %p288 = pneg %p149
        $region38: #{tpu_custom_call.1} parent=31 // pred_check_branch
          %290 = sbr.rel (%p288) target = $region40
        $region39: #{tpu_custom_call.1} parent=31 // pred_region
          %s291 = sand.u32 %s139, 1
          %s292 = scalar_lea.sflag [#allocation13], %s291
          %s293 = sand.u32 %s139, 1
          %s294 = smul.addr %s293, 24
          %s295 = scalar_lea.vmem [#allocation12], %s294
          %s297 = ssub.s32 384, 384
          %298 = vsyncadd %s292, %s297
          %s299 = smul.addr %s31, 3
          %s300 = sadd.s32 %s32, %s299
          %s301 = smul.addr %s300, 128
          %s302 = scalar_lea.hbm %s4, %s301
          %s303 = sshll.u32 %s295, 4
          %s304 = int_to_ptr.vmem [resolvable:$true] %s303
          %309 = dma.hbm_to_vmem [thread:$0]  %s302, 384, %s304, %s292, 128, 128, 8
        $region40: #{tpu_custom_call.1} parent=31 // pred_fallthru
          _
      $region32: #{tpu_custom_call.1} parent=5 // pred_fallthru
        _
      %p310 = scmp.le.s32.totalorder 1, %s24
      %p311 = scmp.lt.s32.totalorder %s24, 3
      %p312 = pnand %p310, %p311
      %p313 = pneg %p312
      // Predicated region
      $region41: #{tpu_custom_call.1} parent=5 // pred_check
        _
      $region42: #{tpu_custom_call.1} parent=5 // pred_check_branch
        %315 = sbr.rel (%p312) target = $region44
      $region43: #{tpu_custom_call.1} parent=5 // pred_region
        %s316 = ssub.s32 %s24, 1
        // Predicated region
        $region45: #{tpu_custom_call.1} parent=43 // pred_check
          %p317 = pneg %p57
        $region46: #{tpu_custom_call.1} parent=43 // pred_check_branch
          %319 = sbr.rel (%p317) target = $region48
        $region47: #{tpu_custom_call.1} parent=43 // pred_region
          %320 = dma.done [#allocation6], 64
        $region48: #{tpu_custom_call.1} parent=43 // pred_fallthru
          _
        // Predicated region
        $region49: #{tpu_custom_call.1} parent=43 // pred_check
          %p321 = pneg %p78
        $region50: #{tpu_custom_call.1} parent=43 // pred_check_branch
          %323 = sbr.rel (%p321) target = $region52
        $region51: #{tpu_custom_call.1} parent=43 // pred_region
          %324 = dma.done [#allocation7], 16
        $region52: #{tpu_custom_call.1} parent=43 // pred_fallthru
          _
        // Predicated region
        $region53: #{tpu_custom_call.1} parent=43 // pred_check
          %p325 = pneg %p99
        $region54: #{tpu_custom_call.1} parent=43 // pred_check_branch
          %327 = sbr.rel (%p325) target = $region56
        $region55: #{tpu_custom_call.1} parent=43 // pred_region
          %328 = dma.done [#allocation10], 16
        $region56: #{tpu_custom_call.1} parent=43 // pred_fallthru
          _
        %s329 = sand.u32 %s114, 1
        %s330 = scalar_lea.sflag [#allocation4], %s329
        %s331 = sand.u32 %s114, 1
        %s332 = smul.addr %s331, 120
        %s333 = scalar_lea.vmem [#allocation11], %s332
        // Predicated region
        $region57: #{tpu_custom_call.1} parent=43 // pred_check
          %p334 = pneg %p127
        $region58: #{tpu_custom_call.1} parent=43 // pred_check_branch
          %336 = sbr.rel (%p334) target = $region60
        $region59: #{tpu_custom_call.1} parent=43 // pred_region
          %337 = dma.done %s330, 1920
        $region60: #{tpu_custom_call.1} parent=43 // pred_fallthru
          _
        %s338 = sand.u32 %s142, 1
        %s339 = scalar_lea.sflag [#allocation13], %s338
        %s340 = sand.u32 %s142, 1
        %s341 = smul.addr %s340, 24
        %s342 = scalar_lea.vmem [#allocation12], %s341
        // Predicated region
        $region61: #{tpu_custom_call.1} parent=43 // pred_check
          %p343 = pneg %p155
        $region62: #{tpu_custom_call.1} parent=43 // pred_check_branch
          %345 = sbr.rel (%p343) target = $region64
        $region63: #{tpu_custom_call.1} parent=43 // pred_region
          %346 = dma.done %s339, 384
        $region64: #{tpu_custom_call.1} parent=43 // pred_fallthru
          _
        %347 = sfence
        %p348 = pneg %p57
        %p349 = pneg %p54
        %p350 = pneg %p78
        %p351 = pneg %p75
        %p352 = pneg %p99
        %p353 = pneg %p96
        %s354 = sand.u32 %s114, 1
        %s355 = scalar_lea.sflag [#allocation4], %s354
        %s356 = sand.u32 %s114, 1
        %s357 = smul.addr %s356, 120
        %s358 = scalar_lea.vmem [#allocation11], %s357
        %p359 = pneg %p127
        %p360 = pneg %p124
        %s361 = sand.u32 %s142, 1
        %s362 = scalar_lea.sflag [#allocation13], %s361
        %s363 = sand.u32 %s142, 1
        %s364 = smul.addr %s363, 24
        %s365 = scalar_lea.vmem [#allocation12], %s364
        %p366 = pneg %p155
        %p367 = pneg %p152
        %p368 = scmp.lt.s32.totalorder %s34, 0
        %s369 = scalar_select %p368, %s34, 0
        %s370 = smul.addr %s369, 8
        %s371 = scalar_lea.vmem %s5, %s370
        %p372 = pneg %p181
        %p373 = pneg %p178
        %p374 = pneg %p209
        %p375 = pneg %p206
        %s376 = sand.u32 %s196, 1
        %s377 = scalar_lea.sflag [#allocation5], %s376
        %s378 = sand.u32 %s196, 1
        %s379 = smul.addr %s378, 16
        %s380 = scalar_lea.vmem [#allocation14], %s379
        %p381 = scmp.lt.s32.totalorder %s34, 0
        %s382 = scalar_select %p381, %s34, 0
        %s383 = smul.addr %s382, 8
        %s384 = scalar_lea.vmem %s5, %s383
        %s385 = sadd.s32 %s33, %s34
        %v386 = vld [vmem:[%s384] sm:$0xff]
        %s387 = scalar_lea.vmem %s384, 8
        %v388 = vld [vmem:[%s387] sm:$0xff]
        %v389 = vlaneseq
        %v390 = vshrl.u32 %v389, 7
        %v391 = vlaneseq
        %v392 = vand.u32 %v391, 127
        %s393 = smul.u32 %s34, 1024
        %v394 = vmul.u32 %v390, 128
        %v395 = vstv %s393
        %v396 = vadd.s32 %v395, %v394
        %v397 = vadd.s32 %v396, %v392
        %vm398 = vcmp.lt.s32.totalorder %v397, 256
        %s399 = sld [smem:[#allocation8 + %s33]]
        %s400 = sld [smem:[#allocation9]]
        %s401 = sld [smem:[#allocation9 + $0x1]]
        %v402 = vld [vmem:[%s333] sm:$0xff]
        %s403 = scalar_lea.vmem %s333, 8 [#allocation11]
        %v404 = vld [vmem:[%s403] sm:$0xff]
        %s405 = scalar_lea.vmem %s333, 16 [#allocation11]
        %v406 = vld [vmem:[%s405] sm:$0xff]
        %s407 = scalar_lea.vmem %s333, 24 [#allocation11]
        %v408 = vld [vmem:[%s407] sm:$0xff]
        %s409 = scalar_lea.vmem %s333, 32 [#allocation11]
        %v410 = vld [vmem:[%s409] sm:$0xff]
        %v411 = vxor.u32 %v402, 2147483648
        %v412 = vmul.f32 %v411, 1.442695
        %v413 = vpow.pop %v412
        %v414 = vadd.f32 %v413, 1.0
        %v415 = vrcp.pop %v414
        %v416 = vmul.f32 1.0, %v415
        %v417 = vadd.f32 %v416, %v386
        %v418 = vxor.u32 %v404, 2147483648
        %v419 = vmul.f32 %v418, 1.442695
        %v420 = vpow.pop %v419
        %v421 = vadd.f32 %v420, 1.0
        %v422 = vrcp.pop %v421
        %v423 = vmul.f32 1.0, %v422
        %v424 = vadd.f32 %v423, %v388
        %v425 = vmul.f32 %v406, 1.442695
        %v426 = vpow.pop %v425
        %v427 = vstv %s400
        %v428 = vmul.f32 %v426, %v427
        %v429 = vmul.f32 %v408, 1.442695
        %v430 = vpow.pop %v429
        %v431 = vstv %s401
        %v432 = vmul.f32 %v430, %v431
        %v433 = vmul.f32 %v428, 0.5
        %v434 = vsub.f32 %v417, %v433
        %v435 = vadd.f32 %v417, %v433
        %v436 = vmul.f32 %v432, 0.5
        %v437 = vsub.f32 %v424, %v436
        %v438 = vadd.f32 %v424, %v436
        %v439 = vmul.f32 %v428, %v432
        %440 = vst [vmem:[#allocation2] sm:$0xff] 0.0
        // While loop
        $region65: #{tpu_custom_call.1} parent=43 // loop_pre_header
          _
        $region66: #{tpu_custom_call.1} parent=43 // loop_header
          %s442 = sphi 0, %s444
          %p443 = scmp.ge.s32.totalorder %s442, %s399
        $region67: #{tpu_custom_call.1} parent=43 // loop_header_branch
          %446 = sbr.rel (%p443) target = $region71
        $region68: #{tpu_custom_call.1} parent=43 // loop_body
          %s447 = smul.u32 %s33, 32
          %s448 = sadd.s32 %s447, %s442
          %s449 = smul.u32 %s448, 8
          %s450 = sld [smem:[#allocation3 + %s449]]
          %s451 = sadd.s32 %s449, 1
          %s452 = sld [smem:[#allocation3 + %s451]]
          %s453 = sadd.s32 %s449, 2
          %s454 = sld [smem:[#allocation3 + %s453]]
          %s455 = sadd.s32 %s449, 3
          %s456 = sld [smem:[#allocation3 + %s455]]
          %s457 = sadd.s32 %s449, 4
          %s458 = sld [smem:[#allocation3 + %s457]]
          %v459 = vstv %s454
          %v460 = vmin.f32 %v435, %v459
          %v461 = vstv %s450
          %v462 = vmax.f32 %v434, %v461
          %v463 = vsub.f32 %v460, %v462
          %v464 = vmax.f32 %v463, 0.0
          %v465 = vstv %s456
          %v466 = vmin.f32 %v438, %v465
          %v467 = vstv %s452
          %v468 = vmax.f32 %v437, %v467
          %v469 = vsub.f32 %v466, %v468
          %v470 = vmax.f32 %v469, 0.0
          %v471 = vmul.f32 %v464, %v470
          %v472 = vstv %s458
          %v473 = vadd.f32 %v439, %v472
          %v474 = vsub.f32 %v473, %v471
          %v475 = vmul.f32 %v474, 0.5
          %vm476 = vcmp.gt.f32.partialorder %v471, %v475
          %v477 = vsel %vm476, 1, 0
          %v478 = vcvt.s32.f32 %v477
          %v479 = vld [vmem:[#allocation2] sm:$0xff]
          %v480 = vmax.f32 %v479, %v478
          %481 = vst [vmem:[#allocation2] sm:$0xff] %v480
        $region69: #{tpu_custom_call.1} parent=43 // loop_footer
          %s444 = sadd.s32 %s442, 1
        $region70: #{tpu_custom_call.1} parent=43 // loop_footer_branch
          %441 = sbr.rel target = $region66
        $region71: #{tpu_custom_call.1} parent=43 // loop_exit
          _
        %v482 = vld [vmem:[#allocation2] sm:$0xff]
        %vm483 = vcmp.gt.f32.partialorder %v482, 0.0
        %v484 = vld [vmem:[%s342] sm:$0xff]
        %vm485 = vcmp.gt.f32.partialorder %v484, 0.5
        %v486 = vsel %vm485, 1, 0
        %v487 = vcvt.s32.f32 %v486
        %v488 = vmax.f32 %v410, 0.0
        %v489 = vmul.f32 %v410, %v487
        %v490 = vsub.f32 %v488, %v489
        %v491 = vand.u32 2147483647, %v410
        %v492 = vsub.f32 0.0, %v491
        %v493 = vmul.f32 %v492, 1.442695
        %v494 = vpow.pop %v493
        %v495 = vadd.f32 %v494, 1.0
        %v496 = vlog2.pop %v495
        %v497 = vmul.f32 %v496, 0.6931472
        %v498 = vadd.f32 %v490, %v497
        %vm499 = vmxor %vm485, 1
        %vm500 = vmxor %vm483, 1
        %vm501 = vmand %vm499, %vm500
        %vm502 = vmand %vm398, %vm501
        %vm503 = vmor %vm485, %vm502
        %v504 = vsel %vm503, %v498, 0.0
        %v505 = vadd.f32 %v504, 0.0
        %v506 = vsel %vm503, 1, 0
        %v507 = vcvt.s32.f32 %v506
        %v508 = vadd.f32 %v507, 0.0
        %s509 = sld [smem:[#allocation9 + $0x2]]
        %s510 = sld [smem:[#allocation9 + $0x3]]
        %s511 = scalar_lea.vmem %s333, 40 [#allocation11]
        %v512 = vld [vmem:[%s511] sm:$0xff]
        %s513 = scalar_lea.vmem %s333, 48 [#allocation11]
        %v514 = vld [vmem:[%s513] sm:$0xff]
        %s515 = scalar_lea.vmem %s333, 56 [#allocation11]
        %v516 = vld [vmem:[%s515] sm:$0xff]
        %s517 = scalar_lea.vmem %s333, 64 [#allocation11]
        %v518 = vld [vmem:[%s517] sm:$0xff]
        %s519 = scalar_lea.vmem %s333, 72 [#allocation11]
        %v520 = vld [vmem:[%s519] sm:$0xff]
        %v521 = vxor.u32 %v512, 2147483648
        %v522 = vmul.f32 %v521, 1.442695
        %v523 = vpow.pop %v522
        %v524 = vadd.f32 %v523, 1.0
        %v525 = vrcp.pop %v524
        %v526 = vmul.f32 1.0, %v525
        %v527 = vadd.f32 %v526, %v386
        %v528 = vxor.u32 %v514, 2147483648
        %v529 = vmul.f32 %v528, 1.442695
        %v530 = vpow.pop %v529
        %v531 = vadd.f32 %v530, 1.0
        %v532 = vrcp.pop %v531
        %v533 = vmul.f32 1.0, %v532
        %v534 = vadd.f32 %v533, %v388
        %v535 = vmul.f32 %v516, 1.442695
        %v536 = vpow.pop %v535
        %v537 = vstv %s509
        %v538 = vmul.f32 %v536, %v537
        %v539 = vmul.f32 %v518, 1.442695
        %v540 = vpow.pop %v539
        %v541 = vstv %s510
        %v542 = vmul.f32 %v540, %v541
        %v543 = vmul.f32 %v538, 0.5
        %v544 = vsub.f32 %v527, %v543
        %v545 = vadd.f32 %v527, %v543
        %v546 = vmul.f32 %v542, 0.5
        %v547 = vsub.f32 %v534, %v546
        %v548 = vadd.f32 %v534, %v546
        %v549 = vmul.f32 %v538, %v542
        %550 = vst [vmem:[#allocation2] sm:$0xff] 0.0
        // While loop
        $region72: #{tpu_custom_call.1} parent=43 // loop_pre_header
          _
        $region73: #{tpu_custom_call.1} parent=43 // loop_header
          %s552 = sphi 0, %s554
          %p553 = scmp.ge.s32.totalorder %s552, %s399
        $region74: #{tpu_custom_call.1} parent=43 // loop_header_branch
          %556 = sbr.rel (%p553) target = $region78
        $region75: #{tpu_custom_call.1} parent=43 // loop_body
          %s557 = smul.u32 %s33, 32
          %s558 = sadd.s32 %s557, %s552
          %s559 = smul.u32 %s558, 8
          %s560 = sld [smem:[#allocation3 + %s559]]
          %s561 = sadd.s32 %s559, 1
          %s562 = sld [smem:[#allocation3 + %s561]]
          %s563 = sadd.s32 %s559, 2
          %s564 = sld [smem:[#allocation3 + %s563]]
          %s565 = sadd.s32 %s559, 3
          %s566 = sld [smem:[#allocation3 + %s565]]
          %s567 = sadd.s32 %s559, 4
          %s568 = sld [smem:[#allocation3 + %s567]]
          %v569 = vstv %s564
          %v570 = vmin.f32 %v545, %v569
          %v571 = vstv %s560
          %v572 = vmax.f32 %v544, %v571
          %v573 = vsub.f32 %v570, %v572
          %v574 = vmax.f32 %v573, 0.0
          %v575 = vstv %s566
          %v576 = vmin.f32 %v548, %v575
          %v577 = vstv %s562
          %v578 = vmax.f32 %v547, %v577
          %v579 = vsub.f32 %v576, %v578
          %v580 = vmax.f32 %v579, 0.0
          %v581 = vmul.f32 %v574, %v580
          %v582 = vstv %s568
          %v583 = vadd.f32 %v549, %v582
          %v584 = vsub.f32 %v583, %v581
          %v585 = vmul.f32 %v584, 0.5
          %vm586 = vcmp.gt.f32.partialorder %v581, %v585
          %v587 = vsel %vm586, 1, 0
          %v588 = vcvt.s32.f32 %v587
          %v589 = vld [vmem:[#allocation2] sm:$0xff]
          %v590 = vmax.f32 %v589, %v588
          %591 = vst [vmem:[#allocation2] sm:$0xff] %v590
        $region76: #{tpu_custom_call.1} parent=43 // loop_footer
          %s554 = sadd.s32 %s552, 1
        $region77: #{tpu_custom_call.1} parent=43 // loop_footer_branch
          %551 = sbr.rel target = $region73
        $region78: #{tpu_custom_call.1} parent=43 // loop_exit
          _
        %v592 = vld [vmem:[#allocation2] sm:$0xff]
        %vm593 = vcmp.gt.f32.partialorder %v592, 0.0
        %s594 = scalar_lea.vmem %s342, 8 [#allocation12]
        %v595 = vld [vmem:[%s594] sm:$0xff]
        %vm596 = vcmp.gt.f32.partialorder %v595, 0.5
        %v597 = vsel %vm596, 1, 0
        %v598 = vcvt.s32.f32 %v597
        %v599 = vmax.f32 %v520, 0.0
        %v600 = vmul.f32 %v520, %v598
        %v601 = vsub.f32 %v599, %v600
        %v602 = vand.u32 2147483647, %v520
        %v603 = vsub.f32 0.0, %v602
        %v604 = vmul.f32 %v603, 1.442695
        %v605 = vpow.pop %v604
        %v606 = vadd.f32 %v605, 1.0
        %v607 = vlog2.pop %v606
        %v608 = vmul.f32 %v607, 0.6931472
        %v609 = vadd.f32 %v601, %v608
        %vm610 = vmxor %vm596, 1
        %vm611 = vmxor %vm593, 1
        %vm612 = vmand %vm610, %vm611
        %vm613 = vmand %vm398, %vm612
        %vm614 = vmor %vm596, %vm613
        %v615 = vsel %vm614, %v609, 0.0
        %v616 = vadd.f32 %v505, %v615
        %v617 = vsel %vm614, 1, 0
        %v618 = vcvt.s32.f32 %v617
        %v619 = vadd.f32 %v508, %v618
        %s620 = sld [smem:[#allocation9 + $0x4]]
        %s621 = sld [smem:[#allocation9 + $0x5]]
        %s622 = scalar_lea.vmem %s333, 80 [#allocation11]
        %v623 = vld [vmem:[%s622] sm:$0xff]
        %s624 = scalar_lea.vmem %s333, 88 [#allocation11]
        %v625 = vld [vmem:[%s624] sm:$0xff]
        %s626 = scalar_lea.vmem %s333, 96 [#allocation11]
        %v627 = vld [vmem:[%s626] sm:$0xff]
        %s628 = scalar_lea.vmem %s333, 104 [#allocation11]
        %v629 = vld [vmem:[%s628] sm:$0xff]
        %s630 = scalar_lea.vmem %s333, 112 [#allocation11]
        %v631 = vld [vmem:[%s630] sm:$0xff]
        %v632 = vxor.u32 %v623, 2147483648
        %v633 = vmul.f32 %v632, 1.442695
        %v634 = vpow.pop %v633
        %v635 = vadd.f32 %v634, 1.0
        %v636 = vrcp.pop %v635
        %v637 = vmul.f32 1.0, %v636
        %v638 = vadd.f32 %v637, %v386
        %v639 = vxor.u32 %v625, 2147483648
        %v640 = vmul.f32 %v639, 1.442695
        %v641 = vpow.pop %v640
        %v642 = vadd.f32 %v641, 1.0
        %v643 = vrcp.pop %v642
        %v644 = vmul.f32 1.0, %v643
        %v645 = vadd.f32 %v644, %v388
        %v646 = vmul.f32 %v627, 1.442695
        %v647 = vpow.pop %v646
        %v648 = vstv %s620
        %v649 = vmul.f32 %v647, %v648
        %v650 = vmul.f32 %v629, 1.442695
        %v651 = vpow.pop %v650
        %v652 = vstv %s621
        %v653 = vmul.f32 %v651, %v652
        %v654 = vmul.f32 %v649, 0.5
        %v655 = vsub.f32 %v638, %v654
        %v656 = vadd.f32 %v638, %v654
        %v657 = vmul.f32 %v653, 0.5
        %v658 = vsub.f32 %v645, %v657
        %v659 = vadd.f32 %v645, %v657
        %v660 = vmul.f32 %v649, %v653
        %661 = vst [vmem:[#allocation2] sm:$0xff] 0.0
        // While loop
        $region79: #{tpu_custom_call.1} parent=43 // loop_pre_header
          _
        $region80: #{tpu_custom_call.1} parent=43 // loop_header
          %s663 = sphi 0, %s665
          %p664 = scmp.ge.s32.totalorder %s663, %s399
        $region81: #{tpu_custom_call.1} parent=43 // loop_header_branch
          %667 = sbr.rel (%p664) target = $region85
        $region82: #{tpu_custom_call.1} parent=43 // loop_body
          %s668 = smul.u32 %s33, 32
          %s669 = sadd.s32 %s668, %s663
          %s670 = smul.u32 %s669, 8
          %s671 = sld [smem:[#allocation3 + %s670]]
          %s672 = sadd.s32 %s670, 1
          %s673 = sld [smem:[#allocation3 + %s672]]
          %s674 = sadd.s32 %s670, 2
          %s675 = sld [smem:[#allocation3 + %s674]]
          %s676 = sadd.s32 %s670, 3
          %s677 = sld [smem:[#allocation3 + %s676]]
          %s678 = sadd.s32 %s670, 4
          %s679 = sld [smem:[#allocation3 + %s678]]
          %v680 = vstv %s675
          %v681 = vmin.f32 %v656, %v680
          %v682 = vstv %s671
          %v683 = vmax.f32 %v655, %v682
          %v684 = vsub.f32 %v681, %v683
          %v685 = vmax.f32 %v684, 0.0
          %v686 = vstv %s677
          %v687 = vmin.f32 %v659, %v686
          %v688 = vstv %s673
          %v689 = vmax.f32 %v658, %v688
          %v690 = vsub.f32 %v687, %v689
          %v691 = vmax.f32 %v690, 0.0
          %v692 = vmul.f32 %v685, %v691
          %v693 = vstv %s679
          %v694 = vadd.f32 %v660, %v693
          %v695 = vsub.f32 %v694, %v692
          %v696 = vmul.f32 %v695, 0.5
          %vm697 = vcmp.gt.f32.partialorder %v692, %v696
          %v698 = vsel %vm697, 1, 0
          %v699 = vcvt.s32.f32 %v698
          %v700 = vld [vmem:[#allocation2] sm:$0xff]
          %v701 = vmax.f32 %v700, %v699
          %702 = vst [vmem:[#allocation2] sm:$0xff] %v701
        $region83: #{tpu_custom_call.1} parent=43 // loop_footer
          %s665 = sadd.s32 %s663, 1
        $region84: #{tpu_custom_call.1} parent=43 // loop_footer_branch
          %662 = sbr.rel target = $region80
        $region85: #{tpu_custom_call.1} parent=43 // loop_exit
          _
        %v703 = vld [vmem:[#allocation2] sm:$0xff]
        %vm704 = vcmp.gt.f32.partialorder %v703, 0.0
        %s705 = scalar_lea.vmem %s342, 16 [#allocation12]
        %v706 = vld [vmem:[%s705] sm:$0xff]
        %vm707 = vcmp.gt.f32.partialorder %v706, 0.5
        %v708 = vsel %vm707, 1, 0
        %v709 = vcvt.s32.f32 %v708
        %v710 = vmax.f32 %v631, 0.0
        %v711 = vmul.f32 %v631, %v709
        %v712 = vsub.f32 %v710, %v711
        %v713 = vand.u32 2147483647, %v631
        %v714 = vsub.f32 0.0, %v713
        %v715 = vmul.f32 %v714, 1.442695
        %v716 = vpow.pop %v715
        %v717 = vadd.f32 %v716, 1.0
        %v718 = vlog2.pop %v717
        %v719 = vmul.f32 %v718, 0.6931472
        %v720 = vadd.f32 %v712, %v719
        %vm721 = vmxor %vm707, 1
        %vm722 = vmxor %vm704, 1
        %vm723 = vmand %vm721, %vm722
        %vm724 = vmand %vm398, %vm723
        %vm725 = vmor %vm707, %vm724
        %v726 = vsel %vm725, %v720, 0.0
        %v727 = vadd.f32 %v616, %v726
        %v728 = vsel %vm725, 1, 0
        %v729 = vcvt.s32.f32 %v728
        %v730 = vadd.f32 %v619, %v729
        %731 = vst [vmem:[%s380] sm:$0xff] %v727
        %s732 = scalar_lea.vmem %s380, 8 [#allocation14]
        %733 = vst [vmem:[%s732] sm:$0xff] %v730
        %s734 = sand.u32 %s196, 1
        %s735 = scalar_lea.sflag [#allocation5], %s734
        %s736 = sand.u32 %s196, 1
        %s737 = smul.addr %s736, 16
        %s738 = scalar_lea.vmem [#allocation14], %s737
        // Predicated region
        $region86: #{tpu_custom_call.1} parent=43 // pred_check
          %p739 = pneg %p206
        $region87: #{tpu_custom_call.1} parent=43 // pred_check_branch
          %741 = sbr.rel (%p739) target = $region89
        $region88: #{tpu_custom_call.1} parent=43 // pred_region
          %s742 = sadd.s32 %s33, %s34
          %s744 = ssub.s32 256, 256
          %745 = vsyncadd %s735, %s744
          %s746 = smul.addr %s742, 2
          %s747 = smul.addr %s746, 128
          %s748 = scalar_lea.hbm %s6, %s747
          %s749 = sshll.u32 %s738, 4
          %s750 = int_to_ptr.vmem [resolvable:$true] %s749
          %755 = dma.vmem_to_hbm [thread:$0]  %s750, 256, %s748, %s735, 128, 128, 8
        $region89: #{tpu_custom_call.1} parent=43 // pred_fallthru
          _
      $region44: #{tpu_custom_call.1} parent=5 // pred_fallthru
        _
      %p756 = scmp.le.s32.totalorder 2, %s24
      // Predicated region
      $region90: #{tpu_custom_call.1} parent=5 // pred_check
        %p757 = pneg %p756
      $region91: #{tpu_custom_call.1} parent=5 // pred_check_branch
        %759 = sbr.rel (%p757) target = $region93
      $region92: #{tpu_custom_call.1} parent=5 // pred_region
        %s760 = ssub.s32 %s24, 2
        // Predicated region
        $region94: #{tpu_custom_call.1} parent=92 // pred_check
          %p761 = pneg %p212
        $region95: #{tpu_custom_call.1} parent=92 // pred_check_branch
          %763 = sbr.rel (%p761) target = $region97
        $region96: #{tpu_custom_call.1} parent=92 // pred_region
          %s764 = sand.u32 %s197, 1
          %s765 = scalar_lea.sflag [#allocation5], %s764
          %s766 = sand.u32 %s197, 1
          %s767 = smul.addr %s766, 16
          %s768 = scalar_lea.vmem [#allocation14], %s767
          %769 = dma.done %s765, 256
        $region97: #{tpu_custom_call.1} parent=92 // pred_fallthru
          _
      $region93: #{tpu_custom_call.1} parent=5 // pred_fallthru
        _
    $region6: #{tpu_custom_call.1} parent=1 // loop_footer
      %s28 = sadd.s32 1, %s24
    $region7: #{tpu_custom_call.1} parent=1 // loop_footer_branch
      %23 = sbr.rel target = $region3
    $region8: #{tpu_custom_call.1} parent=1 // loop_exit
      _
    %770 = vsyncpa [#allocation4], 1
    %s771 = scalar_lea.sflag [#allocation4], 1
    %772 = vsyncpa %s771, 1
    %773 = vsyncpa [#allocation13], 1
    %s774 = scalar_lea.sflag [#allocation13], 1
    %775 = vsyncpa %s774, 1
    %776 = vsyncpa [#allocation5], 1
    %s777 = scalar_lea.sflag [#allocation5], 1
    %778 = vsyncpa %s777, 1
    %779 = vsyncpa [#allocation6], 1
    %s780 = scalar_lea.sflag [#allocation6], 1
    %781 = vsyncpa %s780, 1
    %782 = vsyncpa [#allocation7], 1
    %s783 = scalar_lea.sflag [#allocation7], 1
    %784 = vsyncpa %s783, 1
    %785 = vsyncpa [#allocation10], 1

</llo_original>
